<compile_context>
chip_gen: v7x
topology: tpu7x:2x2x1
jax: 0.10.0
libtpu: 0.0.40
codegen_flags: <defaults>
</compile_context>

<pallas_src>
import math
import functools

import jax
import jax.numpy as jnp
from jax import lax
from jax.experimental import pallas as pl
from jax.experimental.pallas import tpu as pltpu


def _attention_map_kernel(x_ref, wqkv_ref, bqkv_ref, mask_ref,
                          probs_ref, val_ref, qk_scratch, *,
                          num_heads, head_size, hidden):
    # x_ref     : [1, S, H]   current batch element (resident across heads)
    # wqkv_ref  : [H, 3H]     fused weights, columns = [q_h0|k_h0|q_h1|k_h1|...|V]
    #                         (Q columns pre-scaled by 1/sqrt(head_size))
    # bqkv_ref  : [1, 3H]     fused biases (same column order), f32
    # mask_ref  : [1, 1, S]   additive attention mask for current batch, f32
    # probs_ref : [1, 1, S, S]  probs block for (batch, head)
    # val_ref   : [1, S, H]   value layer, heads concatenated (lane-dense)
    # qk_scratch: [nh, S, 2*dh] per-head (q | k) panels, head on leading axis
    h = pl.program_id(1)

    @pl.when(h == 0)
    def _project_qkv():
        x = x_ref[0]                                                   # [S, H]
        qkv = jnp.dot(x, wqkv_ref[...],
                      preferred_element_type=jnp.float32) + bqkv_ref[...]
        # Value layer: one lane-dense store of all heads.
        val_ref[0] = qkv[:, 2 * hidden:].astype(val_ref.dtype)        # [S, H]
        # Stash per-head (q | k) panels; static slices, static leading index.
        for hh in range(num_heads):
            lo = hh * 2 * head_size
            qk_scratch[hh] = qkv[:, lo:lo + 2 * head_size].astype(qk_scratch.dtype)

    # Per-head scores / softmax (reads the scratch filled at h == 0).
    qk = qk_scratch[h]                                                 # [S, 2*dh]
    q = qk[:, :head_size]
    k = qk[:, head_size:]

    # Q @ K^T without transposing K (contract last dims of both operands).
    scores = lax.dot_general(q, k, (((1,), (1,)), ((), ())),
                             preferred_element_type=jnp.float32)       # [S, S]
    scores = scores + mask_ref[0]                # scale already folded into Wq

    m = jnp.max(scores, axis=-1, keepdims=True)
    e = jnp.exp(scores - m)
    denom = jnp.sum(e, axis=-1, keepdims=True)
    p = e * pl.reciprocal(denom)                 # exact: rows sum to 1

    probs_ref[0, 0] = p.astype(probs_ref.dtype)


def _vmem_capacity_bytes():
    try:
        return int(pltpu.get_tpu_info().vmem_capacity_bytes)
    except Exception:
        return 64 * 1024 * 1024      # conservative: v7x physical per-core VMEM


def attention_map(hidden_states, wq, bq, wk, bk, wv, bv,
                  attention_mask=None, *, num_heads, probs_dtype=None):
    """hidden_states: [B, S, H]; w*: [H, H] torch-style (out, in); b*: [H];
    attention_mask: additive mask with B*S elements (or None).

    Returns (attention_probs [B, nh, S, S], value_layer [B, nh, S, dh])."""
    B, S, H = hidden_states.shape
    assert H % num_heads == 0
    dh = H // num_heads
    compute_dtype = hidden_states.dtype
    probs_dtype = probs_dtype or compute_dtype
    act_itemsize = jnp.dtype(compute_dtype).itemsize
    probs_itemsize = jnp.dtype(probs_dtype).itemsize

    # --- Fuse weights. torch y = x @ W.T + b. Column order:
    #     [q_h0 | k_h0 | q_h1 | k_h1 | ... | V(all heads)], with the softmax
    #     scale 1/sqrt(dh) folded into the Q columns / bias.
    scale = 1.0 / math.sqrt(dh)
    wq_t = (wq * scale).T            # [H, H]
    wk_t = wk.T
    wv_t = wv.T
    qk_w_cols, qk_b_cols = [], []
    for h in range(num_heads):
        qk_w_cols.append(wq_t[:, h * dh:(h + 1) * dh])
        qk_w_cols.append(wk_t[:, h * dh:(h + 1) * dh])
        qk_b_cols.append(bq[h * dh:(h + 1) * dh] * scale)
        qk_b_cols.append(bk[h * dh:(h + 1) * dh])
    wqkv = jnp.concatenate(qk_w_cols + [wv_t], axis=1).astype(compute_dtype)  # [H, 3H]
    bqkv = jnp.concatenate(qk_b_cols + [bv]).astype(jnp.float32).reshape(1, 3 * H)

    if attention_mask is None:
        mask = jnp.zeros((B, 1, S), dtype=jnp.float32)
    else:
        mask = attention_mask.astype(jnp.float32).reshape(B, 1, S)

    kernel = functools.partial(_attention_map_kernel,
                               num_heads=num_heads, head_size=dh, hidden=H)

    # --- Generation-aware VMEM budget.
    block_bytes = 2 * (S * H * act_itemsize          # x (double-buffered)
                       + S * S * probs_itemsize      # probs block
                       + S * H * act_itemsize        # value block
                       + S * 4)                      # mask
    weight_bytes = H * 3 * H * act_itemsize + 3 * H * 4
    scratch_bytes = num_heads * S * max(2 * dh, 128) * act_itemsize
    temp_bytes = S * 3 * H * 4 + 3 * S * S * 4
    vmem_needed = block_bytes + 2 * weight_bytes + scratch_bytes + temp_bytes
    cap = _vmem_capacity_bytes()
    vmem_limit = int(min(max(int(1.5 * vmem_needed), 32 * 1024 * 1024),
                         cap - 8 * 1024 * 1024))

    cost = pl.CostEstimate(
        flops=2 * B * S * H * 3 * H + 2 * B * num_heads * S * S * dh,
        transcendentals=B * num_heads * S * S,
        bytes_accessed=(B * S * H * act_itemsize + H * 3 * H * act_itemsize
                        + 3 * H * 4 + B * S * 4
                        + B * num_heads * S * S * probs_itemsize
                        + B * S * H * act_itemsize),
    )

    out_shape = (
        jax.ShapeDtypeStruct((B, num_heads, S, S), probs_dtype),
        jax.ShapeDtypeStruct((B, S, H), compute_dtype),
    )
    out_specs = [
        pl.BlockSpec((1, 1, S, S), lambda b, h: (b, h, 0, 0)),   # per-head probs
        pl.BlockSpec((1, S, H),    lambda b, h: (b, 0, 0)),      # value (resident over h)
    ]

    def _call(single_buffer_weights):
        if single_buffer_weights:
            w_spec = pl.BlockSpec((H, 3 * H), lambda b, h: (0, 0),
                                  pipeline_mode=pl.Buffered(1))
            b_spec = pl.BlockSpec((1, 3 * H), lambda b, h: (0, 0),
                                  pipeline_mode=pl.Buffered(1))
        else:
            w_spec = pl.BlockSpec((H, 3 * H), lambda b, h: (0, 0))
            b_spec = pl.BlockSpec((1, 3 * H), lambda b, h: (0, 0))
        return pl.pallas_call(
            kernel,
            out_shape=out_shape,
            grid_spec=pltpu.PrefetchScalarGridSpec(
                num_scalar_prefetch=0,
                grid=(B, num_heads),
                in_specs=[
                    pl.BlockSpec((1, S, H), lambda b, h: (b, 0, 0)),  # hidden_states
                    w_spec,                                            # fused Wqkv
                    b_spec,                                            # fused bias
                    pl.BlockSpec((1, 1, S), lambda b, h: (b, 0, 0)),  # additive mask
                ],
                out_specs=out_specs,
                scratch_shapes=[pltpu.VMEM((num_heads, S, 2 * dh), compute_dtype)],
            ),
            compiler_params=pltpu.CompilerParams(
                dimension_semantics=("parallel", "arbitrary"),
                vmem_limit_bytes=vmem_limit),
            cost_estimate=cost,
        )(hidden_states, wqkv, bqkv, mask)

    try:
        probs, values_flat = _call(True)
    except Exception:
        # Portability fallback: pipeline_mode / Buffered(1) not supported by
        # this JAX / Mosaic version -> accept default double-buffered weights.
        probs, values_flat = _call(False)

    # [B, S, H] -> [B, nh, S, dh] (transpose_for_scores), done in the wrapper
    # so the kernel's value store stays lane-dense.
    value_layer = jnp.transpose(values_flat.reshape(B, S, num_heads, dh),
                                (0, 2, 1, 3))
    return probs, value_layer


def _reference(hidden_states, wq, bq, wk, bk, wv, bv, attention_mask, num_heads):
    """Pure-JAX reference mirroring the torch forward."""
    B, S, H = hidden_states.shape
    dh = H // num_heads

    def proj(x, w, b):
        return x @ w.T + b

    def split_heads(x):
        return jnp.transpose(x.reshape(B, S, num_heads, dh), (0, 2, 1, 3))

    q = split_heads(proj(hidden_states, wq, bq))
    k = split_heads(proj(hidden_states, wk, bk))
    v = split_heads(proj(hidden_states, wv, bv))
    scores = jnp.einsum("bhqd,bhkd->bhqk", q, k) / math.sqrt(dh)
    if attention_mask is not None:
        scores = scores + attention_mask.reshape(B, 1, 1, S)
    probs = jax.nn.softmax(scores, axis=-1)
    return probs, v


if __name__ == "__main__":
    # Small RoBERTa-like config: hidden=32, heads=4 (head_size=8), seq=8, batch=2.
    B, S, H, NH = 2, 8, 32, 4

    key = jax.random.PRNGKey(0)
    ks = jax.random.split(key, 8)
    hidden_states = jax.random.normal(ks[0], (B, S, H), dtype=jnp.float32)
    wq = jax.random.normal(ks[1], (H, H), dtype=jnp.float32) * 0.05
    wk = jax.random.normal(ks[2], (H, H), dtype=jnp.float32) * 0.05
    wv = jax.random.normal(ks[3], (H, H), dtype=jnp.float32) * 0.05
    bq = jax.random.normal(ks[4], (H,), dtype=jnp.float32) * 0.05
    bk = jax.random.normal(ks[5], (H,), dtype=jnp.float32) * 0.05
    bv = jax.random.normal(ks[6], (H,), dtype=jnp.float32) * 0.05
    # HF-style additive mask: 0 for attended positions, large negative for masked.
    attn_mask = jnp.where(
        jax.random.uniform(ks[7], (B, S)) < 0.85, 0.0, -10000.0).astype(jnp.float32)

    probs, values = attention_map(hidden_states, wq, bq, wk, bk, wv, bv,
                                  attn_mask, num_heads=NH)
    jax.block_until_ready((probs, values))

    ref_probs, ref_values = _reference(hidden_states, wq, bq, wk, bk, wv, bv,
                                       attn_mask, NH)
    assert probs.shape == (B, NH, S, S)
    assert values.shape == (B, NH, S, H // NH)
    assert jnp.allclose(probs, ref_probs, atol=2e-5, rtol=2e-5)
    assert jnp.allclose(values, ref_values, atol=1e-5, rtol=1e-5)

    print("KERNEL_OK")
</pallas_src>

<mosaic_0001>
module attributes {stable_mosaic.version = 11 : i64} {
  func.func @_attention_map_kernel(%arg0: i32, %arg1: i32, %arg2: memref<1x8x32xf32, #tpu.memory_space<vmem>>, %arg3: memref<32x96xf32, #tpu.memory_space<vmem>>, %arg4: memref<1x96xf32, #tpu.memory_space<vmem>>, %arg5: memref<1x1x8xf32, #tpu.memory_space<vmem>>, %arg6: memref<1x1x8x8xf32, #tpu.memory_space<vmem>>, %arg7: memref<1x8x32xf32, #tpu.memory_space<vmem>>, %arg8: memref<4x8x16xf32, #tpu.memory_space<vmem>>) attributes {dimension_semantics = [#tpu.dimension_semantics<parallel>, #tpu.dimension_semantics<arbitrary>], iteration_bounds = array<i64: 2, 4>, scalar_prefetch = 0 : i64, scratch_operands = 1 : i64, tpu.core_type = #tpu.core_type<tc>, window_params = [{transform_indices = @transform_0, window_bounds = array<i64: 1, 8, 32>}, {pipeline_mode = #tpu.pipeline_mode<synchronous>, transform_indices = @transform_1, window_bounds = array<i64: 32, 96>}, {pipeline_mode = #tpu.pipeline_mode<synchronous>, transform_indices = @transform_2, window_bounds = array<i64: 1, 96>}, {transform_indices = @transform_3, window_bounds = array<i64: 1, 1, 8>}, {transform_indices = @transform_4, window_bounds = array<i64: 1, 1, 8, 8>}, {transform_indices = @transform_5, window_bounds = array<i64: 1, 8, 32>}]} {
    %c0_i32 = arith.constant 0 : i32
    %0 = arith.cmpi eq, %arg1, %c0_i32 : i32
    %1 = arith.extui %0 : i1 to i32
    %c0_i32_0 = arith.constant 0 : i32
    %2 = arith.cmpi ne, %1, %c0_i32_0 : i32
    scf.if %2 {
      %c0_11 = arith.constant 0 : index
      %c0_12 = arith.constant 0 : index
      %c0_13 = arith.constant 0 : index
      %26 = vector.load %arg2[%c0_11, %c0_12, %c0_13] : memref<1x8x32xf32, #tpu.memory_space<vmem>>, vector<1x8x32xf32>
      %27 = vector.shape_cast %26 : vector<1x8x32xf32> to vector<8x32xf32>
      %c0_14 = arith.constant 0 : index
      %c0_15 = arith.constant 0 : index
      %28 = vector.load %arg3[%c0_14, %c0_15] : memref<32x96xf32, #tpu.memory_space<vmem>>, vector<32x96xf32>
      %cst_16 = arith.constant dense<0.000000e+00> : vector<8x96xf32>
      %29 = tpu.matmul %27, %28, %cst_16 {dimension_numbers = #tpu.dot_dimension_numbers<[1], [0], [0], [1], [0, 0, 1, 1], [], []>} : vector<8x32xf32>, vector<32x96xf32>, vector<8x96xf32> -> vector<8x96xf32>
      %c0_17 = arith.constant 0 : index
      %c0_18 = arith.constant 0 : index
      %30 = vector.load %arg4[%c0_17, %c0_18] : memref<1x96xf32, #tpu.memory_space<vmem>>, vector<1x96xf32>
      %31 = vector.broadcast %30 : vector<1x96xf32> to vector<8x96xf32>
      %32 = arith.addf %29, %31 : vector<8x96xf32>
      %33 = vector.extract_strided_slice %32 {offsets = [0, 64], sizes = [8, 32], strides = [1, 1]} : vector<8x96xf32> to vector<8x32xf32>
      %c0_19 = arith.constant 0 : index
      %c0_20 = arith.constant 0 : index
      %c0_21 = arith.constant 0 : index
      %34 = vector.load %arg7[%c0_19, %c0_20, %c0_21] : memref<1x8x32xf32, #tpu.memory_space<vmem>>, vector<1x8x32xf32>
      %35 = vector.shape_cast %34 : vector<1x8x32xf32> to vector<8x32xf32>
      %36 = vector.shape_cast %33 : vector<8x32xf32> to vector<1x8x32xf32>
      tpu.vector_store %arg7[%c0_19, %c0_20, %c0_21], %36 {strides = array<i32>} : memref<1x8x32xf32, #tpu.memory_space<vmem>>, vector<1x8x32xf32>,
      %37 = vector.extract_strided_slice %32 {offsets = [0, 0], sizes = [8, 16], strides = [1, 1]} : vector<8x96xf32> to vector<8x16xf32>
      %c0_22 = arith.constant 0 : index
      %c0_23 = arith.constant 0 : index
      %c0_24 = arith.constant 0 : index
      %38 = vector.load %arg8[%c0_22, %c0_23, %c0_24] : memref<4x8x16xf32, #tpu.memory_space<vmem>>, vector<1x8x16xf32>
      %39 = vector.shape_cast %38 : vector<1x8x16xf32> to vector<8x16xf32>
      %40 = vector.shape_cast %37 : vector<8x16xf32> to vector<1x8x16xf32>
      tpu.vector_store %arg8[%c0_22, %c0_23, %c0_24], %40 {strides = array<i32>} : memref<4x8x16xf32, #tpu.memory_space<vmem>>, vector<1x8x16xf32>,
      %41 = vector.extract_strided_slice %32 {offsets = [0, 16], sizes = [8, 16], strides = [1, 1]} : vector<8x96xf32> to vector<8x16xf32>
      %c1 = arith.constant 1 : index
      %c0_25 = arith.constant 0 : index
      %c0_26 = arith.constant 0 : index
      %42 = vector.load %arg8[%c1, %c0_25, %c0_26] : memref<4x8x16xf32, #tpu.memory_space<vmem>>, vector<1x8x16xf32>
      %43 = vector.shape_cast %42 : vector<1x8x16xf32> to vector<8x16xf32>
      %44 = vector.shape_cast %41 : vector<8x16xf32> to vector<1x8x16xf32>
      tpu.vector_store %arg8[%c1, %c0_25, %c0_26], %44 {strides = array<i32>} : memref<4x8x16xf32, #tpu.memory_space<vmem>>, vector<1x8x16xf32>,
      %45 = vector.extract_strided_slice %32 {offsets = [0, 32], sizes = [8, 16], strides = [1, 1]} : vector<8x96xf32> to vector<8x16xf32>
      %c2 = arith.constant 2 : index
      %c0_27 = arith.constant 0 : index
      %c0_28 = arith.constant 0 : index
      %46 = vector.load %arg8[%c2, %c0_27, %c0_28] : memref<4x8x16xf32, #tpu.memory_space<vmem>>, vector<1x8x16xf32>
      %47 = vector.shape_cast %46 : vector<1x8x16xf32> to vector<8x16xf32>
      %48 = vector.shape_cast %45 : vector<8x16xf32> to vector<1x8x16xf32>
      tpu.vector_store %arg8[%c2, %c0_27, %c0_28], %48 {strides = array<i32>} : memref<4x8x16xf32, #tpu.memory_space<vmem>>, vector<1x8x16xf32>,
      %49 = vector.extract_strided_slice %32 {offsets = [0, 48], sizes = [8, 16], strides = [1, 1]} : vector<8x96xf32> to vector<8x16xf32>
      %c3 = arith.constant 3 : index
      %c0_29 = arith.constant 0 : index
      %c0_30 = arith.constant 0 : index
      %50 = vector.load %arg8[%c3, %c0_29, %c0_30] : memref<4x8x16xf32, #tpu.memory_space<vmem>>, vector<1x8x16xf32>
      %51 = vector.shape_cast %50 : vector<1x8x16xf32> to vector<8x16xf32>
      %52 = vector.shape_cast %49 : vector<8x16xf32> to vector<1x8x16xf32>
      tpu.vector_store %arg8[%c3, %c0_29, %c0_30], %52 {strides = array<i32>} : memref<4x8x16xf32, #tpu.memory_space<vmem>>, vector<1x8x16xf32>,
    } else {
    }
    %3 = arith.index_cast %arg1 : i32 to index
    %c0 = arith.constant 0 : index
    %c0_1 = arith.constant 0 : index
    %4 = vector.load %arg8[%3, %c0, %c0_1] : memref<4x8x16xf32, #tpu.memory_space<vmem>>, vector<1x8x16xf32>
    %5 = vector.shape_cast %4 : vector<1x8x16xf32> to vector<8x16xf32>
    %6 = vector.extract_strided_slice %5 {offsets = [0, 0], sizes = [8, 8], strides = [1, 1]} : vector<8x16xf32> to vector<8x8xf32>
    %7 = vector.extract_strided_slice %5 {offsets = [0, 8], sizes = [8, 8], strides = [1, 1]} : vector<8x16xf32> to vector<8x8xf32>
    %cst = arith.constant dense<0.000000e+00> : vector<8x8xf32>
    %8 = tpu.matmul %6, %7, %cst {dimension_numbers = #tpu.dot_dimension_numbers<[1], [1], [0], [0], [0, 0, 1, 0], [], []>} : vector<8x8xf32>, vector<8x8xf32>, vector<8x8xf32> -> vector<8x8xf32>
    %c0_2 = arith.constant 0 : index
    %c0_3 = arith.constant 0 : index
    %c0_4 = arith.constant 0 : index
    %9 = vector.load %arg5[%c0_2, %c0_3, %c0_4] : memref<1x1x8xf32, #tpu.memory_space<vmem>>, vector<1x1x8xf32>
    %10 = vector.shape_cast %9 : vector<1x1x8xf32> to vector<1x8xf32>
    %11 = vector.broadcast %10 : vector<1x8xf32> to vector<8x8xf32>
    %12 = arith.addf %8, %11 : vector<8x8xf32>
    %cst_5 = arith.constant dense<0xFF800000> : vector<8xf32>
    %13 = vector.multi_reduction <maximumf>, %12, %cst_5 [1] : vector<8x8xf32> to vector<8xf32>
    %14 = vector.shape_cast %13 : vector<8xf32> to vector<8x1xf32>
    %15 = vector.broadcast %14 : vector<8x1xf32> to vector<8x8xf32>
    %16 = arith.subf %12, %15 : vector<8x8xf32>
    %17 = math.exp %16 : vector<8x8xf32>
    %cst_6 = arith.constant dense<0.000000e+00> : vector<8xf32>
    %18 = vector.multi_reduction <add>, %17, %cst_6 [1] : vector<8x8xf32> to vector<8xf32>
    %19 = vector.shape_cast %18 : vector<8xf32> to vector<8x1xf32>
    %20 = tpu.reciprocal %19 : vector<8x1xf32> -> vector<8x1xf32>
    %21 = vector.broadcast %20 : vector<8x1xf32> to vector<8x8xf32>
    %22 = arith.mulf %17, %21 : vector<8x8xf32>
    %c0_7 = arith.constant 0 : index
    %c0_8 = arith.constant 0 : index
    %c0_9 = arith.constant 0 : index
    %c0_10 = arith.constant 0 : index
    %23 = vector.load %arg6[%c0_7, %c0_8, %c0_9, %c0_10] : memref<1x1x8x8xf32, #tpu.memory_space<vmem>>, vector<1x1x8x8xf32>
    %24 = vector.shape_cast %23 : vector<1x1x8x8xf32> to vector<8x8xf32>
    %25 = vector.shape_cast %22 : vector<8x8xf32> to vector<1x1x8x8xf32>
    tpu.vector_store %arg6[%c0_7, %c0_8, %c0_9, %c0_10], %25 {strides = array<i32>} : memref<1x1x8x8xf32, #tpu.memory_space<vmem>>, vector<1x1x8x8xf32>,
    return
  }
  func.func @transform_0(%arg0: i32, %arg1: i32) -> (i32, i32, i32) {
    %c0_i32 = arith.constant 0 : i32
    %c0_i32_0 = arith.constant 0 : i32
    %c0_i32_1 = arith.constant 0 : i32
    return %arg0, %c0_i32, %c0_i32_0 : i32, i32, i32
  }
  func.func @transform_1(%arg0: i32, %arg1: i32) -> (i32, i32) {
    %c0_i32 = arith.constant 0 : i32
    %c0_i32_0 = arith.constant 0 : i32
    %c0_i32_1 = arith.constant 0 : i32
    return %c0_i32, %c0_i32_0 : i32, i32
  }
  func.func @transform_2(%arg0: i32, %arg1: i32) -> (i32, i32) {
    %c0_i32 = arith.constant 0 : i32
    %c0_i32_0 = arith.constant 0 : i32
    %c0_i32_1 = arith.constant 0 : i32
    return %c0_i32, %c0_i32_0 : i32, i32
  }
  func.func @transform_3(%arg0: i32, %arg1: i32) -> (i32, i32, i32) {
    %c0_i32 = arith.constant 0 : i32
    %c0_i32_0 = arith.constant 0 : i32
    %c0_i32_1 = arith.constant 0 : i32
    return %arg0, %c0_i32, %c0_i32_0 : i32, i32, i32
  }
  func.func @transform_4(%arg0: i32, %arg1: i32) -> (i32, i32, i32, i32) {
    %c0_i32 = arith.constant 0 : i32
    %c0_i32_0 = arith.constant 0 : i32
    %c0_i32_1 = arith.constant 0 : i32
    return %arg0, %arg1, %c0_i32, %c0_i32_0 : i32, i32, i32, i32
  }
  func.func @transform_5(%arg0: i32, %arg1: i32) -> (i32, i32, i32) {
    %c0_i32 = arith.constant 0 : i32
    %c0_i32_0 = arith.constant 0 : i32
    %c0_i32_1 = arith.constant 0 : i32
    return %arg0, %c0_i32, %c0_i32_0 : i32, i32, i32
  }
}

module attributes {stable_mosaic.version = 11 : i64} {
  func.func @_attention_map_kernel(%arg0: i32, %arg1: i32, %arg2: memref<1x8x32xf32, #tpu.memory_space<vmem>>, %arg3: memref<32x96xf32, #tpu.memory_space<vmem>>, %arg4: memref<1x96xf32, #tpu.memory_space<vmem>>, %arg5: memref<1x1x8xf32, #tpu.memory_space<vmem>>, %arg6: memref<1x1x8x8xf32, #tpu.memory_space<vmem>>, %arg7: memref<1x8x32xf32, #tpu.memory_space<vmem>>, %arg8: memref<4x8x16xf32, #tpu.memory_space<vmem>>) attributes {dimension_semantics = [#tpu.dimension_semantics<parallel>, #tpu.dimension_semantics<arbitrary>], iteration_bounds = array<i64: 2, 4>, scalar_prefetch = 0 : i64, scratch_operands = 1 : i64, tpu.core_type = #tpu.core_type<tc>, window_params = [{transform_indices = @transform_0, window_bounds = array<i64: 1, 8, 32>}, {pipeline_mode = #tpu.pipeline_mode<synchronous>, transform_indices = @transform_1, window_bounds = array<i64: 32, 96>}, {pipeline_mode = #tpu.pipeline_mode<synchronous>, transform_indices = @transform_2, window_bounds = array<i64: 1, 96>}, {transform_indices = @transform_3, window_bounds = array<i64: 1, 1, 8>}, {transform_indices = @transform_4, window_bounds = array<i64: 1, 1, 8, 8>}, {transform_indices = @transform_5, window_bounds = array<i64: 1, 8, 32>}]} {
    %c0_i32 = arith.constant 0 : i32
    %0 = arith.cmpi eq, %arg1, %c0_i32 : i32
    %1 = arith.extui %0 : i1 to i32
    %c0_i32_0 = arith.constant 0 : i32
    %2 = arith.cmpi ne, %1, %c0_i32_0 : i32
    scf.if %2 {
      %c0_11 = arith.constant 0 : index
      %c0_12 = arith.constant 0 : index
      %c0_13 = arith.constant 0 : index
      %26 = vector.load %arg2[%c0_11, %c0_12, %c0_13] : memref<1x8x32xf32, #tpu.memory_space<vmem>>, vector<1x8x32xf32>
      %27 = vector.shape_cast %26 : vector<1x8x32xf32> to vector<8x32xf32>
      %c0_14 = arith.constant 0 : index
      %c0_15 = arith.constant 0 : index
      %28 = vector.load %arg3[%c0_14, %c0_15] : memref<32x96xf32, #tpu.memory_space<vmem>>, vector<32x96xf32>
      %cst_16 = arith.constant dense<0.000000e+00> : vector<8x96xf32>
      %29 = tpu.matmul %27, %28, %cst_16 {dimension_numbers = #tpu.dot_dimension_numbers<[1], [0], [0], [1], [0, 0, 1, 1], [], []>} : vector<8x32xf32>, vector<32x96xf32>, vector<8x96xf32> -> vector<8x96xf32>
      %c0_17 = arith.constant 0 : index
      %c0_18 = arith.constant 0 : index
      %30 = vector.load %arg4[%c0_17, %c0_18] : memref<1x96xf32, #tpu.memory_space<vmem>>, vector<1x96xf32>
      %31 = vector.broadcast %30 : vector<1x96xf32> to vector<8x96xf32>
      %32 = arith.addf %29, %31 : vector<8x96xf32>
      %33 = vector.extract_strided_slice %32 {offsets = [0, 64], sizes = [8, 32], strides = [1, 1]} : vector<8x96xf32> to vector<8x32xf32>
      %c0_19 = arith.constant 0 : index
      %c0_20 = arith.constant 0 : index
      %c0_21 = arith.constant 0 : index
      %34 = vector.load %arg7[%c0_19, %c0_20, %c0_21] : memref<1x8x32xf32, #tpu.memory_space<vmem>>, vector<1x8x32xf32>
      %35 = vector.shape_cast %34 : vector<1x8x32xf32> to vector<8x32xf32>
      %36 = vector.shape_cast %33 : vector<8x32xf32> to vector<1x8x32xf32>
      tpu.vector_store %arg7[%c0_19, %c0_20, %c0_21], %36 {strides = array<i32>} : memref<1x8x32xf32, #tpu.memory_space<vmem>>, vector<1x8x32xf32>,
      %37 = vector.extract_strided_slice %32 {offsets = [0, 0], sizes = [8, 16], strides = [1, 1]} : vector<8x96xf32> to vector<8x16xf32>
      %c0_22 = arith.constant 0 : index
      %c0_23 = arith.constant 0 : index
      %c0_24 = arith.constant 0 : index
      %38 = vector.load %arg8[%c0_22, %c0_23, %c0_24] : memref<4x8x16xf32, #tpu.memory_space<vmem>>, vector<1x8x16xf32>
      %39 = vector.shape_cast %38 : vector<1x8x16xf32> to vector<8x16xf32>
      %40 = vector.shape_cast %37 : vector<8x16xf32> to vector<1x8x16xf32>
      tpu.vector_store %arg8[%c0_22, %c0_23, %c0_24], %40 {strides = array<i32>} : memref<4x8x16xf32, #tpu.memory_space<vmem>>, vector<1x8x16xf32>,
      %41 = vector.extract_strided_slice %32 {offsets = [0, 16], sizes = [8, 16], strides = [1, 1]} : vector<8x96xf32> to vector<8x16xf32>
      %c1 = arith.constant 1 : index
      %c0_25 = arith.constant 0 : index
      %c0_26 = arith.constant 0 : index
      %42 = vector.load %arg8[%c1, %c0_25, %c0_26] : memref<4x8x16xf32, #tpu.memory_space<vmem>>, vector<1x8x16xf32>
      %43 = vector.shape_cast %42 : vector<1x8x16xf32> to vector<8x16xf32>
      %44 = vector.shape_cast %41 : vector<8x16xf32> to vector<1x8x16xf32>
      tpu.vector_store %arg8[%c1, %c0_25, %c0_26], %44 {strides = array<i32>} : memref<4x8x16xf32, #tpu.memory_space<vmem>>, vector<1x8x16xf32>,
      %45 = vector.extract_strided_slice %32 {offsets = [0, 32], sizes = [8, 16], strides = [1, 1]} : vector<8x96xf32> to vector<8x16xf32>
      %c2 = arith.constant 2 : index
      %c0_27 = arith.constant 0 : index
      %c0_28 = arith.constant 0 : index
      %46 = vector.load %arg8[%c2, %c0_27, %c0_28] : memref<4x8x16xf32, #tpu.memory_space<vmem>>, vector<1x8x16xf32>
      %47 = vector.shape_cast %46 : vector<1x8x16xf32> to vector<8x16xf32>
      %48 = vector.shape_cast %45 : vector<8x16xf32> to vector<1x8x16xf32>
      tpu.vector_store %arg8[%c2, %c0_27, %c0_28], %48 {strides = array<i32>} : memref<4x8x16xf32, #tpu.memory_space<vmem>>, vector<1x8x16xf32>,
      %49 = vector.extract_strided_slice %32 {offsets = [0, 48], sizes = [8, 16], strides = [1, 1]} : vector<8x96xf32> to vector<8x16xf32>
      %c3 = arith.constant 3 : index
      %c0_29 = arith.constant 0 : index
      %c0_30 = arith.constant 0 : index
      %50 = vector.load %arg8[%c3, %c0_29, %c0_30] : memref<4x8x16xf32, #tpu.memory_space<vmem>>, vector<1x8x16xf32>
      %51 = vector.shape_cast %50 : vector<1x8x16xf32> to vector<8x16xf32>
      %52 = vector.shape_cast %49 : vector<8x16xf32> to vector<1x8x16xf32>
      tpu.vector_store %arg8[%c3, %c0_29, %c0_30], %52 {strides = array<i32>} : memref<4x8x16xf32, #tpu.memory_space<vmem>>, vector<1x8x16xf32>,
    } else {
    }
    %3 = arith.index_cast %arg1 : i32 to index
    %c0 = arith.constant 0 : index
    %c0_1 = arith.constant 0 : index
    %4 = vector.load %arg8[%3, %c0, %c0_1] : memref<4x8x16xf32, #tpu.memory_space<vmem>>, vector<1x8x16xf32>
    %5 = vector.shape_cast %4 : vector<1x8x16xf32> to vector<8x16xf32>
    %6 = vector.extract_strided_slice %5 {offsets = [0, 0], sizes = [8, 8], strides = [1, 1]} : vector<8x16xf32> to vector<8x8xf32>
    %7 = vector.extract_strided_slice %5 {offsets = [0, 8], sizes = [8, 8], strides = [1, 1]} : vector<8x16xf32> to vector<8x8xf32>
    %cst = arith.constant dense<0.000000e+00> : vector<8x8xf32>
    %8 = tpu.matmul %6, %7, %cst {dimension_numbers = #tpu.dot_dimension_numbers<[1], [1], [0], [0], [0, 0, 1, 0], [], []>} : vector<8x8xf32>, vector<8x8xf32>, vector<8x8xf32> -> vector<8x8xf32>
    %c0_2 = arith.constant 0 : index
    %c0_3 = arith.constant 0 : index
    %c0_4 = arith.constant 0 : index
    %9 = vector.load %arg5[%c0_2, %c0_3, %c0_4] : memref<1x1x8xf32, #tpu.memory_space<vmem>>, vector<1x1x8xf32>
    %10 = vector.shape_cast %9 : vector<1x1x8xf32> to vector<1x8xf32>
    %11 = vector.broadcast %10 : vector<1x8xf32> to vector<8x8xf32>
    %12 = arith.addf %8, %11 : vector<8x8xf32>
    %cst_5 = arith.constant dense<0xFF800000> : vector<8xf32>
    %13 = vector.multi_reduction <maximumf>, %12, %cst_5 [1] : vector<8x8xf32> to vector<8xf32>
    %14 = vector.shape_cast %13 : vector<8xf32> to vector<8x1xf32>
    %15 = vector.broadcast %14 : vector<8x1xf32> to vector<8x8xf32>
    %16 = arith.subf %12, %15 : vector<8x8xf32>
    %17 = math.exp %16 : vector<8x8xf32>
    %cst_6 = arith.constant dense<0.000000e+00> : vector<8xf32>
    %18 = vector.multi_reduction <add>, %17, %cst_6 [1] : vector<8x8xf32> to vector<8xf32>
    %19 = vector.shape_cast %18 : vector<8xf32> to vector<8x1xf32>
    %20 = tpu.reciprocal %19 : vector<8x1xf32> -> vector<8x1xf32>
    %21 = vector.broadcast %20 : vector<8x1xf32> to vector<8x8xf32>
    %22 = arith.mulf %17, %21 : vector<8x8xf32>
    %c0_7 = arith.constant 0 : index
    %c0_8 = arith.constant 0 : index
    %c0_9 = arith.constant 0 : index
    %c0_10 = arith.constant 0 : index
    %23 = vector.load %arg6[%c0_7, %c0_8, %c0_9, %c0_10] : memref<1x1x8x8xf32, #tpu.memory_space<vmem>>, vector<1x1x8x8xf32>
    %24 = vector.shape_cast %23 : vector<1x1x8x8xf32> to vector<8x8xf32>
    %25 = vector.shape_cast %22 : vector<8x8xf32> to vector<1x1x8x8xf32>
    tpu.vector_store %arg6[%c0_7, %c0_8, %c0_9, %c0_10], %25 {strides = array<i32>} : memref<1x1x8x8xf32, #tpu.memory_space<vmem>>, vector<1x1x8x8xf32>,
    return
  }
  func.func @transform_0(%arg0: i32, %arg1: i32) -> (i32, i32, i32) {
    %c0_i32 = arith.constant 0 : i32
    %c0_i32_0 = arith.constant 0 : i32
    %c0_i32_1 = arith.constant 0 : i32
    return %arg0, %c0_i32, %c0_i32_0 : i32, i32, i32
  }
  func.func @transform_1(%arg0: i32, %arg1: i32) -> (i32, i32) {
    %c0_i32 = arith.constant 0 : i32
    %c0_i32_0 = arith.constant 0 : i32
    %c0_i32_1 = arith.constant 0 : i32
    return %c0_i32, %c0_i32_0 : i32, i32
  }
  func.func @transform_2(%arg0: i32, %arg1: i32) -> (i32, i32) {
    %c0_i32 = arith.constant 0 : i32
    %c0_i32_0 = arith.constant 0 : i32
    %c0_i32_1 = arith.constant 0 : i32
    return %c0_i32, %c0_i32_0 : i32, i32
  }
  func.func @transform_3(%arg0: i32, %arg1: i32) -> (i32, i32, i32) {
    %c0_i32 = arith.constant 0 : i32
    %c0_i32_0 = arith.constant 0 : i32
    %c0_i32_1 = arith.constant 0 : i32
    return %arg0, %c0_i32, %c0_i32_0 : i32, i32, i32
  }
  func.func @transform_4(%arg0: i32, %arg1: i32) -> (i32, i32, i32, i32) {
    %c0_i32 = arith.constant 0 : i32
    %c0_i32_0 = arith.constant 0 : i32
    %c0_i32_1 = arith.constant 0 : i32
    return %arg0, %arg1, %c0_i32, %c0_i32_0 : i32, i32, i32, i32
  }
  func.func @transform_5(%arg0: i32, %arg1: i32) -> (i32, i32, i32) {
    %c0_i32 = arith.constant 0 : i32
    %c0_i32_0 = arith.constant 0 : i32
    %c0_i32_1 = arith.constant 0 : i32
    return %arg0, %c0_i32, %c0_i32_0 : i32, i32, i32
  }
}

</mosaic_0001>

<llo_original>
// kernel: tpu_custom_call.1
$region0: #{tpu_custom_call.1}
  #allocation0 [shape = 'u32[]', space=smem, size = 0x4, offset = 0x4, fixed_abs, tag = 'smem constant byte address 0x4 - core index']
  #allocation1 [shape = 'u32[144,128]{1,0:T(1,128)}', space=vmem, size = 0x12000, scoped, tag = 'internal scratch']
  #allocation2 [shape = 'f32[4,8,16]{2,1,0:T(8,128)}', space=vmem, size = 0x4000, scoped, tag = 'scratch operand']
  %s0 = inlined_call_operand.hbm [shape: f32[2,8,32], index: 0, kind: input, shape index: {}]
  %s1 = inlined_call_operand.hbm [shape: f32[32,96], index: 1, kind: input, shape index: {}]
  %s2 = inlined_call_operand.vmem [shape: f32[1,96], index: 2, kind: input, shape index: {}]
  %s3 = inlined_call_operand.vmem [shape: f32[2,1,8], index: 3, kind: input, shape index: {}]
  %s4 = inlined_call_operand.hbm [shape: f32[2,4,8,8], index: 4, kind: output, shape index: {0}]
  %s5 = inlined_call_operand.hbm [shape: f32[2,8,32], index: 5, kind: output, shape index: {1}]
  %6 = xla_tuple %s4, %s5
  %s7 = sld [smem:[#allocation0]]
  $region69: #{tpu_custom_call.1} parent=0
    _
  %s9 = ssub.s32 1, %s7
  %s10 = scalar_select 0, %s9, %s7
  $region1: #{tpu_custom_call.1} parent=0
    #allocation3 [shape = 'u8[8192]{0}', space=vmem, size = 0x2000, scoped, tag = 'input window, operand 0']
    #allocation4 [shape = 's32[2]{0}', space=sflag, size = 0x8, scoped, tag = 'scoped memory for tpu_custom_call.1']
    #allocation5 [shape = 's32[2]{0}', space=sflag, size = 0x8, scoped, tag = 'scoped memory for tpu_custom_call.1']
    #allocation6 [shape = 'u8[16384]{0}', space=vmem, size = 0x4000, scoped, tag = 'input window, operand 1, single buffered']
    #allocation7 [shape = 's32[1]{0}', space=sflag, size = 0x4, scoped, tag = 'scoped memory for tpu_custom_call.1']
    #allocation8 [shape = 'u8[8192]{0}', space=vmem, size = 0x2000, scoped, tag = 'output window, operand 0']
    #allocation9 [shape = 'u8[8192]{0}', space=vmem, size = 0x2000, scoped, tag = 'output window, operand 1']
    #allocation10 [shape = 's32[2]{0}', space=sflag, size = 0x8, scoped, tag = 'scoped memory for tpu_custom_call.1']
    %11 = vsyncpa [#allocation4], 0
    %s12 = scalar_lea.sflag [#allocation4], 1
    %13 = vsyncpa %s12, 0
    %14 = vsyncpa [#allocation7], 0
    %15 = vsyncpa [#allocation5], 0
    %s16 = scalar_lea.sflag [#allocation5], 1
    %17 = vsyncpa %s16, 0
    %18 = vsyncpa [#allocation10], 0
    %s19 = scalar_lea.sflag [#allocation10], 1
    %20 = vsyncpa %s19, 0
    loop: start=0, step=1, limit=10
    $region2: #{tpu_custom_call.1} parent=1 // loop_pre_header
      _
    $region3: #{tpu_custom_call.1} parent=1 // loop_header
      %s22 = sphi 0, %s26
      %p23 = scmp.ge.s32.totalorder %s22, 10
      %s29 = sphi 0, %s41
      %s30 = sphi 0, %s37
      %s31 = sphi 0, %s29
      %s32 = sphi 0, %s30
      %s33 = sphi 0, %s31
      %s34 = sphi 0, %s32
      %s44 = sphi 0, %s46
      %s47 = sphi 0, %s44
      %s48 = sphi 0, %s47
      %s64 = sphi 0, %s48
      %s68 = sphi 0, %s68
      %s70 = sphi 0, %s68
      %s71 = sphi 0, %s70
      %s85 = sphi 0, %s71
      %s89 = sphi 0, %s89
      %s91 = sphi 0, %s89
      %s92 = sphi 0, %s91
      %s106 = sphi 0, %s92
      %s112 = sphi 0, %s114
      %s115 = sphi 0, %s112
      %s116 = sphi 0, %s115
      %s132 = sphi 0, %s116
      %s140 = sphi 0, %s142
      %s143 = sphi 0, %s140
      %s144 = sphi 0, %s143
      %s160 = sphi 0, %s144
      %s166 = sphi 0, %s168
      %s169 = sphi 0, %s166
      %s170 = sphi 0, %s169
      %s186 = sphi 0, %s170
    $region4: #{tpu_custom_call.1} parent=1 // loop_header_branch
      %25 = sbr.rel (%p23) target = $region8
    $region5: #{tpu_custom_call.1} parent=1 // loop_body
      %s27 = ssub.s32 %s22, 1
      %s28 = ssub.s32 %s22, 2
      %s35 = sadd.s32 1, %s30
      %p36 = scmp.ge.s32.totalorder %s35, 4
      %s37 = scalar_select %p36, 0, %s35
      %s38 = sadd.s32 1, %s29
      %s39 = scalar_select %p36, %s38, %s29
      %p40 = scmp.ge.s32.totalorder %s39, 2
      %s41 = scalar_select %p40, 0, %s39
      %s42 = ssub.s32 %s29, %s41
      %p43 = scmp.eq.s32.totalorder %s42, 0
      %s45 = sadd.s32 %s44, 1
      %s46 = scalar_select %p43, %s44, %s45
      %p49 = pneg %p43
      %p50 = scmp.eq.s32.totalorder %s22, 7
      %p51 = por %p49, %p50
      %p52 = scmp.ne.s32.totalorder %s44, %s47
      %p53 = scmp.eq.s32.totalorder %s22, 0
      %p54 = por %p52, %p53
      %p55 = scmp.ne.s32.totalorder %s44, %s47
      %p56 = scmp.eq.s32.totalorder %s27, 7
      %p57 = por %p55, %p56
      %p58 = scmp.ne.s32.totalorder %s47, %s48
      %p59 = scmp.eq.s32.totalorder %s27, 0
      %p60 = por %p58, %p59
      %p61 = scmp.ne.s32.totalorder %s47, %s48
      %p62 = scmp.eq.s32.totalorder %s28, 7
      %p63 = por %p61, %p62
      %p65 = scmp.ne.s32.totalorder %s48, %s64
      %p66 = scmp.eq.s32.totalorder %s28, 0
      %p67 = por %p65, %p66
      %s69 = sadd.s32 %s68, 1
      %p72 = scmp.eq.s32.totalorder %s22, 7
      %p73 = scmp.ne.s32.totalorder %s68, %s70
      %p74 = scmp.eq.s32.totalorder %s22, 0
      %p75 = por %p73, %p74
      %p76 = scmp.ne.s32.totalorder %s68, %s70
      %p77 = scmp.eq.s32.totalorder %s27, 7
      %p78 = por %p76, %p77
      %p79 = scmp.ne.s32.totalorder %s70, %s71
      %p80 = scmp.eq.s32.totalorder %s27, 0
      %p81 = por %p79, %p80
      %p82 = scmp.ne.s32.totalorder %s70, %s71
      %p83 = scmp.eq.s32.totalorder %s28, 7
      %p84 = por %p82, %p83
      %p86 = scmp.ne.s32.totalorder %s71, %s85
      %p87 = scmp.eq.s32.totalorder %s28, 0
      %p88 = por %p86, %p87
      %s90 = sadd.s32 %s89, 1
      %p93 = scmp.eq.s32.totalorder %s22, 7
      %p94 = scmp.ne.s32.totalorder %s89, %s91
      %p95 = scmp.eq.s32.totalorder %s22, 0
      %p96 = por %p94, %p95
      %p97 = scmp.ne.s32.totalorder %s89, %s91
      %p98 = scmp.eq.s32.totalorder %s27, 7
      %p99 = por %p97, %p98
      %p100 = scmp.ne.s32.totalorder %s91, %s92
      %p101 = scmp.eq.s32.totalorder %s27, 0
      %p102 = por %p100, %p101
      %p103 = scmp.ne.s32.totalorder %s91, %s92
      %p104 = scmp.eq.s32.totalorder %s28, 7
      %p105 = por %p103, %p104
      %p107 = scmp.ne.s32.totalorder %s92, %s106
      %p108 = scmp.eq.s32.totalorder %s28, 0
      %p109 = por %p107, %p108
      %s110 = ssub.s32 %s29, %s41
      %p111 = scmp.eq.s32.totalorder %s110, 0
      %s113 = sadd.s32 %s112, 1
      %s114 = scalar_select %p111, %s112, %s113
      %p117 = pneg %p111
      %p118 = scmp.eq.s32.totalorder %s22, 7
      %p119 = por %p117, %p118
      %p120 = scmp.ne.s32.totalorder %s112, %s115
      %p121 = scmp.eq.s32.totalorder %s22, 0
      %p122 = por %p120, %p121
      %p123 = scmp.ne.s32.totalorder %s112, %s115
      %p124 = scmp.eq.s32.totalorder %s27, 7
      %p125 = por %p123, %p124
      %p126 = scmp.ne.s32.totalorder %s115, %s116
      %p127 = scmp.eq.s32.totalorder %s27, 0
      %p128 = por %p126, %p127
      %p129 = scmp.ne.s32.totalorder %s115, %s116
      %p130 = scmp.eq.s32.totalorder %s28, 7
      %p131 = por %p129, %p130
      %p133 = scmp.ne.s32.totalorder %s116, %s132
      %p134 = scmp.eq.s32.totalorder %s28, 0
      %p135 = por %p133, %p134
      %s136 = ssub.s32 %s29, %s41
      %s137 = ssub.s32 %s30, %s37
      %s138 = sor.u32 %s136, %s137
      %p139 = scmp.eq.s32.totalorder %s138, 0
      %s141 = sadd.s32 %s140, 1
      %s142 = scalar_select %p139, %s140, %s141
      %p145 = pneg %p139
      %p146 = scmp.eq.s32.totalorder %s22, 7
      %p147 = por %p145, %p146
      %p148 = scmp.ne.s32.totalorder %s140, %s143
      %p149 = scmp.eq.s32.totalorder %s22, 0
      %p150 = por %p148, %p149
      %p151 = scmp.ne.s32.totalorder %s140, %s143
      %p152 = scmp.eq.s32.totalorder %s27, 7
      %p153 = por %p151, %p152
      %p154 = scmp.ne.s32.totalorder %s143, %s144
      %p155 = scmp.eq.s32.totalorder %s27, 0
      %p156 = por %p154, %p155
      %p157 = scmp.ne.s32.totalorder %s143, %s144
      %p158 = scmp.eq.s32.totalorder %s28, 7
      %p159 = por %p157, %p158
      %p161 = scmp.ne.s32.totalorder %s144, %s160
      %p162 = scmp.eq.s32.totalorder %s28, 0
      %p163 = por %p161, %p162
      %s164 = ssub.s32 %s29, %s41
      %p165 = scmp.eq.s32.totalorder %s164, 0
      %s167 = sadd.s32 %s166, 1
      %s168 = scalar_select %p165, %s166, %s167
      %p171 = pneg %p165
      %p172 = scmp.eq.s32.totalorder %s22, 7
      %p173 = por %p171, %p172
      %p174 = scmp.ne.s32.totalorder %s166, %s169
      %p175 = scmp.eq.s32.totalorder %s22, 0
      %p176 = por %p174, %p175
      %p177 = scmp.ne.s32.totalorder %s166, %s169
      %p178 = scmp.eq.s32.totalorder %s27, 7
      %p179 = por %p177, %p178
      %p180 = scmp.ne.s32.totalorder %s169, %s170
      %p181 = scmp.eq.s32.totalorder %s27, 0
      %p182 = por %p180, %p181
      %p183 = scmp.ne.s32.totalorder %s169, %s170
      %p184 = scmp.eq.s32.totalorder %s28, 7
      %p185 = por %p183, %p184
      %p187 = scmp.ne.s32.totalorder %s170, %s186
      %p188 = scmp.eq.s32.totalorder %s28, 0
      %p189 = por %p187, %p188
      %p190 = scmp.le.s32.totalorder 1, %s22
      %p191 = scmp.lt.s32.totalorder %s22, 9
      %p192 = pnand %p190, %p191
      %p193 = pneg %p192
      // Predicated region
      $region9: #{tpu_custom_call.1} parent=5 // pred_check
        _
      $region10: #{tpu_custom_call.1} parent=5 // pred_check_branch
        %195 = sbr.rel (%p192) target = $region12
      $region11: #{tpu_custom_call.1} parent=5 // pred_region
        %s196 = ssub.s32 %s22, 1
        // Predicated region
        $region13: #{tpu_custom_call.1} parent=11 // pred_check
          %p197 = pneg %p81
        $region14: #{tpu_custom_call.1} parent=11 // pred_check_branch
          %199 = sbr.rel (%p197) target = $region16
        $region15: #{tpu_custom_call.1} parent=11 // pred_region
          %s201 = ssub.s32 512, 512
          %202 = vsyncadd [#allocation7], %s201
          %s203 = sshll.u32 [#allocation6], 4
          %s204 = int_to_ptr.vmem [resolvable:$true] %s203
          %209 = dma.hbm_to_vmem [thread:$0]  %s1, 512, %s204, [#allocation7], 128, 128, 8
        $region16: #{tpu_custom_call.1} parent=11 // pred_fallthru
          _
        // Predicated region
        $region17: #{tpu_custom_call.1} parent=11 // pred_check
          %p210 = pneg %p102
        $region18: #{tpu_custom_call.1} parent=11 // pred_check_branch
          %212 = sbr.rel (%p210) target = $region20
        $region19: #{tpu_custom_call.1} parent=11 // pred_region
          _
        $region20: #{tpu_custom_call.1} parent=11 // pred_fallthru
          _
      $region12: #{tpu_custom_call.1} parent=5 // pred_fallthru
        _
      %p213 = scmp.lt.s32.totalorder %s22, 8
      // Predicated region
      $region21: #{tpu_custom_call.1} parent=5 // pred_check
        %p214 = pneg %p213
      $region22: #{tpu_custom_call.1} parent=5 // pred_check_branch
        %216 = sbr.rel (%p214) target = $region24
      $region23: #{tpu_custom_call.1} parent=5 // pred_region
        // Predicated region
        $region25: #{tpu_custom_call.1} parent=23 // pred_check
          %p217 = pneg %p54
        $region26: #{tpu_custom_call.1} parent=23 // pred_check_branch
          %219 = sbr.rel (%p217) target = $region28
        $region27: #{tpu_custom_call.1} parent=23 // pred_region
          %s220 = sand.u32 %s44, 1
          %s221 = scalar_lea.sflag [#allocation4], %s220
          %s222 = sand.u32 %s44, 1
          %s223 = smul.addr %s222, 8
          %s224 = scalar_lea.vmem [#allocation3], %s223
          %s226 = ssub.s32 128, 128
          %227 = vsyncadd %s221, %s226
          %s228 = smul.addr %s29, 128
          %s229 = scalar_lea.hbm %s0, %s228
          %s231 = sshll.u32 %s224, 4
          %s232 = int_to_ptr.vmem [resolvable:$true] %s231
          %234 = dma.hbm_to_vmem [thread:$0]  %s229, 128, %s232, %s221
        $region28: #{tpu_custom_call.1} parent=23 // pred_fallthru
          _
        // Predicated region
        $region29: #{tpu_custom_call.1} parent=23 // pred_check
          %p235 = pneg %p122
        $region30: #{tpu_custom_call.1} parent=23 // pred_check_branch
          %237 = sbr.rel (%p235) target = $region32
        $region31: #{tpu_custom_call.1} parent=23 // pred_region
          %p238 = scmp.lt.s32.totalorder %s29, 1
          %s239 = scalar_select %p238, %s29, 1
          %s240 = scalar_lea.vmem %s3, %s239
        $region32: #{tpu_custom_call.1} parent=23 // pred_fallthru
          _
      $region24: #{tpu_custom_call.1} parent=5 // pred_fallthru
        _
      %p241 = scmp.le.s32.totalorder 1, %s22
      %p242 = scmp.lt.s32.totalorder %s22, 9
      %p243 = pnand %p241, %p242
      %p244 = pneg %p243
      // Predicated region
      $region33: #{tpu_custom_call.1} parent=5 // pred_check
        _
      $region34: #{tpu_custom_call.1} parent=5 // pred_check_branch
        %246 = sbr.rel (%p243) target = $region36
      $region35: #{tpu_custom_call.1} parent=5 // pred_region
        %s247 = ssub.s32 %s22, 1
        %s248 = sand.u32 %s47, 1
        %s249 = scalar_lea.sflag [#allocation4], %s248
        %s250 = sand.u32 %s47, 1
        %s251 = smul.addr %s250, 8
        %s252 = scalar_lea.vmem [#allocation3], %s251
        // Predicated region
        $region37: #{tpu_custom_call.1} parent=35 // pred_check
          %p253 = pneg %p60
        $region38: #{tpu_custom_call.1} parent=35 // pred_check_branch
          %255 = sbr.rel (%p253) target = $region40
        $region39: #{tpu_custom_call.1} parent=35 // pred_region
          %256 = dma.done %s249, 128
        $region40: #{tpu_custom_call.1} parent=35 // pred_fallthru
          _
        // Predicated region
        $region41: #{tpu_custom_call.1} parent=35 // pred_check
          %p257 = pneg %p81
        $region42: #{tpu_custom_call.1} parent=35 // pred_check_branch
          %259 = sbr.rel (%p257) target = $region44
        $region43: #{tpu_custom_call.1} parent=35 // pred_region
          %260 = dma.done [#allocation7], 512
        $region44: #{tpu_custom_call.1} parent=35 // pred_fallthru
          _
        %s261 = sand.u32 %s47, 1
        %s262 = scalar_lea.sflag [#allocation4], %s261
        %s263 = sand.u32 %s47, 1
        %s264 = smul.addr %s263, 8
        %s265 = scalar_lea.vmem [#allocation3], %s264
        %p266 = pneg %p60
        %p267 = pneg %p57
        %p268 = pneg %p81
        %p269 = pneg %p78
        %p270 = pneg %p102
        %p271 = pneg %p99
        %p272 = scmp.lt.s32.totalorder %s31, 1
        %s273 = scalar_select %p272, %s31, 1
        %s274 = scalar_lea.vmem %s3, %s273
        %p275 = pneg %p128
        %p276 = pneg %p125
        %p277 = pneg %p156
        %p278 = pneg %p153
        %s279 = sand.u32 %s143, 1
        %s280 = scalar_lea.sflag [#allocation5], %s279
        %s281 = sand.u32 %s143, 1
        %s282 = smul.addr %s281, 8
        %s283 = scalar_lea.vmem [#allocation8], %s282
        %p284 = pneg %p182
        %p285 = pneg %p179
        %s286 = sand.u32 %s169, 1
        %s287 = scalar_lea.sflag [#allocation10], %s286
        %s288 = sand.u32 %s169, 1
        %s289 = smul.addr %s288, 8
        %s290 = scalar_lea.vmem [#allocation9], %s289
        %p291 = scmp.lt.s32.totalorder %s31, 1
        %s292 = scalar_select %p291, %s31, 1
        %s293 = scalar_lea.vmem %s3, %s292
        %p294 = scmp.eq.s32.totalorder %s32, 0
        // Predicated region
        $region45: #{tpu_custom_call.1} parent=35 // pred_check
          %p295 = pneg %p294
        $region46: #{tpu_custom_call.1} parent=35 // pred_check_branch
          %297 = sbr.rel (%p295) target = $region48
        $region47: #{tpu_custom_call.1} parent=35 // pred_region
          %v298 = vld [vmem:[%s252] sm:$0xff]
          %v299 = vld [vmem:[#allocation6] sm:$0xff]
          %v300 = vld [vmem:[#allocation6 + $0x8] sm:$0xff]
          %v301 = vld [vmem:[#allocation6 + $0x10] sm:$0xff]
          %v302 = vld [vmem:[#allocation6 + $0x18] sm:$0xff]
          %v303 = vld [vmem:[%s2] sm:$0x1]
          %v305 = vlaneseq
          %v306 = vshrl.u32 %v305, 7
          %v307 = vsub.s32 0, %v306
          %v308 = vrot.slane %v303, %v307
          %vm310 = vcmask 261120
          %v312 = vsel %vm310, %v298, 0
          %314 = vmatprep.subr.mxu0 0.0
          %315 = vmatpush1.msra.mxu0 %v299
          %316 = vmatprep.subr.mxu0 0.0
          %317 = vmatpush1.msra.mxu0 %v300
          %318 = vmatprep.subr.mxu0 0.0
          %319 = vmatpush1.msra.mxu0 %v301
          %320 = vmatprep.subr.mxu0 0.0
          %321 = vmatpush1.msra.mxu0 %v302
          %322 = vmatprep.subr.mxu0 0.0
          %323 = vmatpush1.msra.mxu0 0.0
          %324 = vmatprep.subr.mxu0 0.0
          %325 = vmatpush1.msra.mxu0 0.0
          %326 = vmatprep.subr.mxu0 0.0
          %327 = vmatpush1.msra.mxu0 0.0
          %328 = vmatprep.subr.mxu0 0.0
          %329 = vmatpush1.msra.mxu0 0.0
          %330 = vmatprep.subr.mxu0 0.0
          %331 = vmatpush1.msra.mxu0 0.0
          %332 = vmatprep.subr.mxu0 0.0
          %333 = vmatpush1.msra.mxu0 0.0
          %334 = vmatprep.subr.mxu0 0.0
          %335 = vmatpush1.msra.mxu0 0.0
          %336 = vmatprep.subr.mxu0 0.0
          %337 = vmatpush1.msra.mxu0 0.0
          %338 = vmatprep.subr.mxu0 0.0
          %339 = vmatpush1.msra.mxu0 0.0
          %340 = vmatprep.subr.mxu0 0.0
          %341 = vmatpush1.msra.mxu0 0.0
          %342 = vmatprep.subr.mxu0 0.0
          %343 = vmatpush1.msra.mxu0 0.0
          %344 = vmatprep.subr.mxu0 0.0
          %345 = vmatpush1.msra.mxu0 0.0
          %346 = vmatprep.subr.mxu0 0.0
          %347 = vmatpush1.msra.mxu0 0.0
          %348 = vmatprep.subr.mxu0 0.0
          %349 = vmatpush1.msra.mxu0 0.0
          %350 = vmatprep.subr.mxu0 0.0
          %351 = vmatpush1.msra.mxu0 0.0
          %352 = vmatprep.subr.mxu0 0.0
          %353 = vmatpush1.msra.mxu0 0.0
          %354 = vmatprep.subr.mxu0 0.0
          %355 = vmatpush1.msra.mxu0 0.0
          %356 = vmatprep.subr.mxu0 0.0
          %357 = vmatpush1.msra.mxu0 0.0
          %358 = vmatprep.subr.mxu0 0.0
          %359 = vmatpush1.msra.mxu0 0.0
          %360 = vmatprep.subr.mxu0 0.0
          %361 = vmatpush1.msra.mxu0 0.0
          %362 = vmatprep.subr.mxu0 0.0
          %363 = vmatpush1.msra.mxu0 0.0
          %364 = vmatprep.subr.mxu0 0.0
          %365 = vmatpush1.msra.mxu0 0.0
          %366 = vmatprep.subr.mxu0 0.0
          %367 = vmatpush1.msra.mxu0 0.0
          %368 = vmatprep.subr.mxu0 0.0
          %369 = vmatpush1.msra.mxu0 0.0
          %370 = vmatprep.subr.mxu0 0.0
          %371 = vmatpush1.msra.mxu0 0.0
          %372 = vmatprep.subr.mxu0 0.0
          %373 = vmatpush1.msra.mxu0 0.0
          %374 = vmatprep.subr.mxu0 0.0
          %375 = vmatpush1.msra.mxu0 0.0
          %376 = vmatprep.subr.mxu0 0.0
          %377 = vmatpush1.msra.mxu0 0.0
          %378 = vmatprep.mubr.f32.mxu0 0.0
          %379 = vmatmul.mubr.f32.gmra.mrb[0].mxu0 %v312
          %v380 = vpop.f32.mrb[0].mxu0
          %v381 = vadd.f32 %v308, %v380
          %v382 = vpop.f32.mrb[0].mxu0
          %383 = vdwg.mxu0
          %385 = vrot.lane.b32.xlu0 %v381, 64
          %v386 = vpop.permute.xlu0 %385
          %388 = vst.msk [vmem:[%s290] sm:$0xff] %vm310, %v386
          %vm389 = vcmask 130048
          %390 = vst.msk [vmem:[#allocation2] sm:$0xff] %vm389, %v381
          %391 = vrot.lane.b32.xlu0 %v381, 112
          %v392 = vpop.permute.xlu0 %391
          %s394 = scalar_lea.vmem [#allocation2], 8
          %395 = vst.msk [vmem:[%s394] sm:$0xff] %vm389, %v392
          %396 = vrot.lane.b32.xlu0 %v381, 96
          %v397 = vpop.permute.xlu0 %396
          %s399 = scalar_lea.vmem [#allocation2], 16
          %400 = vst.msk [vmem:[%s399] sm:$0xff] %vm389, %v397
          %401 = vrot.lane.b32.xlu0 %v381, 80
          %v402 = vpop.permute.xlu0 %401
          %s404 = scalar_lea.vmem [#allocation2], 24
          %405 = vst.msk [vmem:[%s404] sm:$0xff] %vm389, %v402
        $region48: #{tpu_custom_call.1} parent=35 // pred_fallthru
          _
        %s406 = smul.u32 %s32, 8
        %s407 = scalar_lea.vmem [#allocation2], %s406
        %v408 = vld [vmem:[%s407] sm:$0xff]
        %v409 = vld [vmem:[%s293] sm:$0x1]
        %v411 = vlaneseq
        %v412 = vshrl.u32 %v411, 7
        %v413 = vsub.s32 0, %v412
        %v414 = vrot.slane %v409, %v413
        %417 = vrot.lane.b32.xlu0 %v408, 120
        %v418 = vpop.permute.xlu0 %417
        %vm419 = vcmask 64512
        %v420 = vsel %vm419, %v408, 0
        %v422 = vsel %vm419, %v418, 0
        %424 = vmatprep.subr.mxu0 0.0
        %425 = vmatpush1.xpose.msra.mxu0 %v422
        %426 = vmatprep.subr.mxu0 0.0
        %427 = vmatpush1.xpose.msra.mxu0 0.0
        %428 = vmatprep.subr.mxu0 0.0
        %429 = vmatpush1.xpose.msra.mxu0 0.0
        %430 = vmatprep.subr.mxu0 0.0
        %431 = vmatpush1.xpose.msra.mxu0 0.0
        %432 = vmatprep.subr.mxu0 0.0
        %433 = vmatpush1.xpose.msra.mxu0 0.0
        %434 = vmatprep.subr.mxu0 0.0
        %435 = vmatpush1.xpose.msra.mxu0 0.0
        %436 = vmatprep.subr.mxu0 0.0
        %437 = vmatpush1.xpose.msra.mxu0 0.0
        %438 = vmatprep.subr.mxu0 0.0
        %439 = vmatpush1.xpose.msra.mxu0 0.0
        %440 = vmatprep.subr.mxu0 0.0
        %441 = vmatpush1.xpose.msra.mxu0 0.0
        %442 = vmatprep.subr.mxu0 0.0
        %443 = vmatpush1.xpose.msra.mxu0 0.0
        %444 = vmatprep.subr.mxu0 0.0
        %445 = vmatpush1.xpose.msra.mxu0 0.0
        %446 = vmatprep.subr.mxu0 0.0
        %447 = vmatpush1.xpose.msra.mxu0 0.0
        %448 = vmatprep.subr.mxu0 0.0
        %449 = vmatpush1.xpose.msra.mxu0 0.0
        %450 = vmatprep.subr.mxu0 0.0
        %451 = vmatpush1.xpose.msra.mxu0 0.0
        %452 = vmatprep.subr.mxu0 0.0
        %453 = vmatpush1.xpose.msra.mxu0 0.0
        %454 = vmatprep.subr.mxu0 0.0
        %455 = vmatpush1.xpose.msra.mxu0 0.0
        %456 = vmatprep.subr.mxu0 0.0
        %457 = vmatpush1.xpose.msra.mxu0 0.0
        %458 = vmatprep.subr.mxu0 0.0
        %459 = vmatpush1.xpose.msra.mxu0 0.0
        %460 = vmatprep.subr.mxu0 0.0
        %461 = vmatpush1.xpose.msra.mxu0 0.0
        %462 = vmatprep.subr.mxu0 0.0
        %463 = vmatpush1.xpose.msra.mxu0 0.0
        %464 = vmatprep.subr.mxu0 0.0
        %465 = vmatpush1.xpose.msra.mxu0 0.0
        %466 = vmatprep.subr.mxu0 0.0
        %467 = vmatpush1.xpose.msra.mxu0 0.0
        %468 = vmatprep.subr.mxu0 0.0
        %469 = vmatpush1.xpose.msra.mxu0 0.0
        %470 = vmatprep.subr.mxu0 0.0
        %471 = vmatpush1.xpose.msra.mxu0 0.0
        %472 = vmatprep.subr.mxu0 0.0
        %473 = vmatpush1.xpose.msra.mxu0 0.0
        %474 = vmatprep.subr.mxu0 0.0
        %475 = vmatpush1.xpose.msra.mxu0 0.0
        %476 = vmatprep.subr.mxu0 0.0
        %477 = vmatpush1.xpose.msra.mxu0 0.0
        %478 = vmatprep.subr.mxu0 0.0
        %479 = vmatpush1.xpose.msra.mxu0 0.0
        %480 = vmatprep.subr.mxu0 0.0
        %481 = vmatpush1.xpose.msra.mxu0 0.0
        %482 = vmatprep.subr.mxu0 0.0
        %483 = vmatpush1.xpose.msra.mxu0 0.0
        %484 = vmatprep.subr.mxu0 0.0
        %485 = vmatpush1.xpose.msra.mxu0 0.0
        %486 = vmatprep.subr.mxu0 0.0
        %487 = vmatpush1.xpose.msra.mxu0 0.0
        %488 = vmatprep.mubr.f32.mxu0 0.0
        %489 = vmatmul.mubr.f32.gmra.mrb[0].mxu0 %v420
        %v490 = vpop.f32.mrb[0].mxu0
        %v491 = vadd.f32 %v414, %v490
        %v492 = vpop.f32.mrb[0].mxu0
        %493 = vdwg.mxu0
        %v494 = vsel %vm419, %v491, -inf
        %495 = vmax.xlane.f32.xlu0 %v494
        %v496 = vpop.xlane.xlu0 %495
        %v497 = vsub.f32 %v491, %v496
        %v498 = vmul.f32 %v497, 1.442695
        %v499 = vpow.pop %v498
        %v500 = vsel %vm419, %v499, 0.0
        %501 = vadd.xlane.f32.xlu0 %v500
        %v502 = vpop.xlane.xlu0 %501
        %v503 = vrcp.pop %v502
        %v504 = vmul.f32 %v499, %v503
        %505 = vst.msk [vmem:[%s283] sm:$0xff] %vm419, %v504
        %s506 = sand.u32 %s143, 1
        %s507 = scalar_lea.sflag [#allocation5], %s506
        %s508 = sand.u32 %s143, 1
        %s509 = smul.addr %s508, 8
        %s510 = scalar_lea.vmem [#allocation8], %s509
        %s511 = sand.u32 %s169, 1
        %s512 = scalar_lea.sflag [#allocation10], %s511
        %s513 = sand.u32 %s169, 1
        %s514 = smul.addr %s513, 8
        %s515 = scalar_lea.vmem [#allocation9], %s514
        // Predicated region
        $region49: #{tpu_custom_call.1} parent=35 // pred_check
          %p516 = pneg %p153
        $region50: #{tpu_custom_call.1} parent=35 // pred_check_branch
          %518 = sbr.rel (%p516) target = $region52
        $region51: #{tpu_custom_call.1} parent=35 // pred_region
          %s520 = ssub.s32 128, 128
          %521 = vsyncadd %s507, %s520
          %s522 = smul.addr %s31, 4
          %s523 = sadd.s32 %s32, %s522
          %s524 = smul.addr %s523, 128
          %s525 = scalar_lea.hbm %s4, %s524
          %s527 = sshll.u32 %s510, 4
          %s528 = int_to_ptr.vmem [resolvable:$true] %s527
          %530 = dma.vmem_to_hbm [thread:$0]  %s528, 128, %s525, %s507
        $region52: #{tpu_custom_call.1} parent=35 // pred_fallthru
          _
        // Predicated region
        $region53: #{tpu_custom_call.1} parent=35 // pred_check
          %p531 = pneg %p179
        $region54: #{tpu_custom_call.1} parent=35 // pred_check_branch
          %533 = sbr.rel (%p531) target = $region56
        $region55: #{tpu_custom_call.1} parent=35 // pred_region
          %s535 = ssub.s32 128, 128
          %536 = vsyncadd %s512, %s535
          %s537 = smul.addr %s31, 128
          %s538 = scalar_lea.hbm %s5, %s537
          %s540 = sshll.u32 %s515, 4
          %s541 = int_to_ptr.vmem [resolvable:$true] %s540
          %543 = dma.vmem_to_hbm [thread:$0]  %s541, 128, %s538, %s512
        $region56: #{tpu_custom_call.1} parent=35 // pred_fallthru
          _
      $region36: #{tpu_custom_call.1} parent=5 // pred_fallthru
        _
      %p544 = scmp.le.s32.totalorder 2, %s22
      // Predicated region
      $region57: #{tpu_custom_call.1} parent=5 // pred_check
        %p545 = pneg %p544
      $region58: #{tpu_custom_call.1} parent=5 // pred_check_branch
        %547 = sbr.rel (%p545) target = $region60
      $region59: #{tpu_custom_call.1} parent=5 // pred_region
        %s548 = ssub.s32 %s22, 2
        // Predicated region
        $region61: #{tpu_custom_call.1} parent=59 // pred_check
          %p549 = pneg %p159
        $region62: #{tpu_custom_call.1} parent=59 // pred_check_branch
          %551 = sbr.rel (%p549) target = $region64
        $region63: #{tpu_custom_call.1} parent=59 // pred_region
          %s552 = sand.u32 %s144, 1
          %s553 = scalar_lea.sflag [#allocation5], %s552
          %s554 = sand.u32 %s144, 1
          %s555 = smul.addr %s554, 8
          %s556 = scalar_lea.vmem [#allocation8], %s555
          %557 = dma.done %s553, 128
        $region64: #{tpu_custom_call.1} parent=59 // pred_fallthru
          _
        // Predicated region
        $region65: #{tpu_custom_call.1} parent=59 // pred_check
          %p558 = pneg %p185
        $region66: #{tpu_custom_call.1} parent=59 // pred_check_branch
          %560 = sbr.rel (%p558) target = $region68
        $region67: #{tpu_custom_call.1} parent=59 // pred_region
          %s561 = sand.u32 %s170, 1
          %s562 = scalar_lea.sflag [#allocation10], %s561
          %s563 = sand.u32 %s170, 1
          %s564 = smul.addr %s563, 8
          %s565 = scalar_lea.vmem [#allocation9], %s564
          %566 = dma.done %s562, 128
        $region68: #{tpu_custom_call.1} parent=59 // pred_fallthru
          _
      $region60: #{tpu_custom_call.1} parent=5 // pred_fallthru
        _
    $region6: #{tpu_custom_call.1} parent=1 // loop_footer
      %s26 = sadd.s32 1, %s22
    $region7: #{tpu_custom_call.1} parent=1 // loop_footer_branch
      %21 = sbr.rel target = $region3
    $region8: #{tpu_custom_call.1} parent=1 // loop_exit
      _
    %567 = vsyncpa [#allocation4], 1
    %s568 = scalar_lea.sflag [#allocation4], 1
    %569 = vsyncpa %s568, 1
    %570 = vsyncpa [#allocation7], 1
    %571 = vsyncpa [#allocation5], 1
    %s572 = scalar_lea.sflag [#allocation5], 1
    %573 = vsyncpa %s572, 1
    %574 = vsyncpa [#allocation10], 1
    %s575 = scalar_lea.sflag [#allocation10], 1
    %576 = vsyncpa %s575, 1

// kernel: tpu_custom_call.1
$region0: #{tpu_custom_call.1}
  #allocation0 [shape = 'u32[]', space=smem, size = 0x4, offset = 0x4, fixed_abs, tag = 'smem constant byte address 0x4 - core index']
  #allocation1 [shape = 'u32[144,128]{1,0:T(1,128)}', space=vmem, size = 0x12000, scoped, tag = 'internal scratch']
  #allocation2 [shape = 'f32[4,8,16]{2,1,0:T(8,128)}', space=vmem, size = 0x4000, scoped, tag = 'scratch operand']
  %s0 = inlined_call_operand.hbm [shape: f32[2,8,32], index: 0, kind: input, shape index: {}]
  %s1 = inlined_call_operand.hbm [shape: f32[32,96], index: 1, kind: input, shape index: {}]
  %s2 = inlined_call_operand.vmem [shape: f32[1,96], index: 2, kind: input, shape index: {}]
  %s3 = inlined_call_operand.vmem [shape: f32[2,1,8], index: 3, kind: input, shape index: {}]
  %s4 = inlined_call_operand.hbm [shape: f32[2,4,8,8], index: 4, kind: output, shape index: {0}]
  %s5 = inlined_call_operand.hbm [shape: f32[2,8,32], index: 5, kind: output, shape index: {1}]
  %6 = xla_tuple %s4, %s5
  %s7 = sld [smem:[#allocation0]]
  $region69: #{tpu_custom_call.1} parent=0
    _
  %s9 = ssub.s32 1, %s7
  %s10 = scalar_select 0, %s9, %s7
  $region1: #{tpu_custom_call.1} parent=0
    #allocation3 [shape = 'u8[8192]{0}', space=vmem, size = 0x2000, scoped, tag = 'input window, operand 0']
    #allocation4 [shape = 's32[2]{0}', space=sflag, size = 0x8, scoped, tag = 'scoped memory for tpu_custom_call.1']
    #allocation5 [shape = 's32[2]{0}', space=sflag, size = 0x8, scoped, tag = 'scoped memory for tpu_custom_call.1']
    #allocation6 [shape = 'u8[16384]{0}', space=vmem, size = 0x4000, scoped, tag = 'input window, operand 1, single buffered']
    #allocation7 [shape = 's32[1]{0}', space=sflag, size = 0x4, scoped, tag = 'scoped memory for tpu_custom_call.1']
    #allocation8 [shape = 'u8[8192]{0}', space=vmem, size = 0x2000, scoped, tag = 'output window, operand 0']
    #allocation9 [shape = 'u8[8192]{0}', space=vmem, size = 0x2000, scoped, tag = 'output window, operand 1']
    #allocation10 [shape = 's32[2]{0}', space=sflag, size = 0x8, scoped, tag = 'scoped memory for tpu_custom_call.1']
    %11 = vsyncpa [#allocation4], 0
    %s12 = scalar_lea.sflag [#allocation4], 1
    %13 = vsyncpa %s12, 0
    %14 = vsyncpa [#allocation7], 0
    %15 = vsyncpa [#allocation5], 0
    %s16 = scalar_lea.sflag [#allocation5], 1
    %17 = vsyncpa %s16, 0
    %18 = vsyncpa [#allocation10], 0
    %s19 = scalar_lea.sflag [#allocation10], 1
    %20 = vsyncpa %s19, 0
    loop: start=0, step=1, limit=10
    $region2: #{tpu_custom_call.1} parent=1 // loop_pre_header
      _
    $region3: #{tpu_custom_call.1} parent=1 // loop_header
      %s22 = sphi 0, %s26
      %p23 = scmp.ge.s32.totalorder %s22, 10
      %s29 = sphi 0, %s41
      %s30 = sphi 0, %s37
      %s31 = sphi 0, %s29
      %s32 = sphi 0, %s30
      %s33 = sphi 0, %s31
      %s34 = sphi 0, %s32
      %s44 = sphi 0, %s46
      %s47 = sphi 0, %s44
      %s48 = sphi 0, %s47
      %s64 = sphi 0, %s48
      %s68 = sphi 0, %s68
      %s70 = sphi 0, %s68
      %s71 = sphi 0, %s70
      %s85 = sphi 0, %s71
      %s89 = sphi 0, %s89
      %s91 = sphi 0, %s89
      %s92 = sphi 0, %s91
      %s106 = sphi 0, %s92
      %s112 = sphi 0, %s114
      %s115 = sphi 0, %s112
      %s116 = sphi 0, %s115
      %s132 = sphi 0, %s116
      %s140 = sphi 0, %s142
      %s143 = sphi 0, %s140
      %s144 = sphi 0, %s143
      %s160 = sphi 0, %s144
      %s166 = sphi 0, %s168
      %s169 = sphi 0, %s166
      %s170 = sphi 0, %s169
      %s186 = sphi 0, %s170
    $region4: #{tpu_custom_call.1} parent=1 // loop_header_branch
      %25 = sbr.rel (%p23) target = $region8
    $region5: #{tpu_custom_call.1} parent=1 // loop_body
      %s27 = ssub.s32 %s22, 1
      %s28 = ssub.s32 %s22, 2
      %s35 = sadd.s32 1, %s30
      %p36 = scmp.ge.s32.totalorder %s35, 4
      %s37 = scalar_select %p36, 0, %s35
      %s38 = sadd.s32 1, %s29
      %s39 = scalar_select %p36, %s38, %s29
      %p40 = scmp.ge.s32.totalorder %s39, 2
      %s41 = scalar_select %p40, 0, %s39
      %s42 = ssub.s32 %s29, %s41
      %p43 = scmp.eq.s32.totalorder %s42, 0
      %s45 = sadd.s32 %s44, 1
      %s46 = scalar_select %p43, %s44, %s45
      %p49 = pneg %p43
      %p50 = scmp.eq.s32.totalorder %s22, 7
      %p51 = por %p49, %p50
      %p52 = scmp.ne.s32.totalorder %s44, %s47
      %p53 = scmp.eq.s32.totalorder %s22, 0
      %p54 = por %p52, %p53
      %p55 = scmp.ne.s32.totalorder %s44, %s47
      %p56 = scmp.eq.s32.totalorder %s27, 7
      %p57 = por %p55, %p56
      %p58 = scmp.ne.s32.totalorder %s47, %s48
      %p59 = scmp.eq.s32.totalorder %s27, 0
      %p60 = por %p58, %p59
      %p61 = scmp.ne.s32.totalorder %s47, %s48
      %p62 = scmp.eq.s32.totalorder %s28, 7
      %p63 = por %p61, %p62
      %p65 = scmp.ne.s32.totalorder %s48, %s64
      %p66 = scmp.eq.s32.totalorder %s28, 0
      %p67 = por %p65, %p66
      %s69 = sadd.s32 %s68, 1
      %p72 = scmp.eq.s32.totalorder %s22, 7
      %p73 = scmp.ne.s32.totalorder %s68, %s70
      %p74 = scmp.eq.s32.totalorder %s22, 0
      %p75 = por %p73, %p74
      %p76 = scmp.ne.s32.totalorder %s68, %s70
      %p77 = scmp.eq.s32.totalorder %s27, 7
      %p78 = por %p76, %p77
      %p79 = scmp.ne.s32.totalorder %s70, %s71
      %p80 = scmp.eq.s32.totalorder %s27, 0
      %p81 = por %p79, %p80
      %p82 = scmp.ne.s32.totalorder %s70, %s71
      %p83 = scmp.eq.s32.totalorder %s28, 7
      %p84 = por %p82, %p83
      %p86 = scmp.ne.s32.totalorder %s71, %s85
      %p87 = scmp.eq.s32.totalorder %s28, 0
      %p88 = por %p86, %p87
      %s90 = sadd.s32 %s89, 1
      %p93 = scmp.eq.s32.totalorder %s22, 7
      %p94 = scmp.ne.s32.totalorder %s89, %s91
      %p95 = scmp.eq.s32.totalorder %s22, 0
      %p96 = por %p94, %p95
      %p97 = scmp.ne.s32.totalorder %s89, %s91
      %p98 = scmp.eq.s32.totalorder %s27, 7
      %p99 = por %p97, %p98
      %p100 = scmp.ne.s32.totalorder %s91, %s92
      %p101 = scmp.eq.s32.totalorder %s27, 0
      %p102 = por %p100, %p101
      %p103 = scmp.ne.s32.totalorder %s91, %s92
      %p104 = scmp.eq.s32.totalorder %s28, 7
      %p105 = por %p103, %p104
      %p107 = scmp.ne.s32.totalorder %s92, %s106
      %p108 = scmp.eq.s32.totalorder %s28, 0
      %p109 = por %p107, %p108
      %s110 = ssub.s32 %s29, %s41
      %p111 = scmp.eq.s32.totalorder %s110, 0
      %s113 = sadd.s32 %s112, 1
      %s114 = scalar_select %p111, %s112, %s113
      %p117 = pneg %p111
      %p118 = scmp.eq.s32.totalorder %s22, 7
      %p119 = por %p117, %p118
      %p120 = scmp.ne.s32.totalorder %s112, %s115
      %p121 = scmp.eq.s32.totalorder %s22, 0
      %p122 = por %p120, %p121
      %p123 = scmp.ne.s32.totalorder %s112, %s115
      %p124 = scmp.eq.s32.totalorder %s27, 7
      %p125 = por %p123, %p124
      %p126 = scmp.ne.s32.totalorder %s115, %s116
      %p127 = scmp.eq.s32.totalorder %s27, 0
      %p128 = por %p126, %p127
      %p129 = scmp.ne.s32.totalorder %s115, %s116
      %p130 = scmp.eq.s32.totalorder %s28, 7
      %p131 = por %p129, %p130
      %p133 = scmp.ne.s32.totalorder %s116, %s132
      %p134 = scmp.eq.s32.totalorder %s28, 0
      %p135 = por %p133, %p134
      %s136 = ssub.s32 %s29, %s41
      %s137 = ssub.s32 %s30, %s37
      %s138 = sor.u32 %s136, %s137
      %p139 = scmp.eq.s32.totalorder %s138, 0
      %s141 = sadd.s32 %s140, 1
      %s142 = scalar_select %p139, %s140, %s141
      %p145 = pneg %p139
      %p146 = scmp.eq.s32.totalorder %s22, 7
      %p147 = por %p145, %p146
      %p148 = scmp.ne.s32.totalorder %s140, %s143
      %p149 = scmp.eq.s32.totalorder %s22, 0
      %p150 = por %p148, %p149
      %p151 = scmp.ne.s32.totalorder %s140, %s143
      %p152 = scmp.eq.s32.totalorder %s27, 7
      %p153 = por %p151, %p152
      %p154 = scmp.ne.s32.totalorder %s143, %s144
      %p155 = scmp.eq.s32.totalorder %s27, 0
      %p156 = por %p154, %p155
      %p157 = scmp.ne.s32.totalorder %s143, %s144
      %p158 = scmp.eq.s32.totalorder %s28, 7
      %p159 = por %p157, %p158
      %p161 = scmp.ne.s32.totalorder %s144, %s160
      %p162 = scmp.eq.s32.totalorder %s28, 0
      %p163 = por %p161, %p162
      %s164 = ssub.s32 %s29, %s41
      %p165 = scmp.eq.s32.totalorder %s164, 0
      %s167 = sadd.s32 %s166, 1
      %s168 = scalar_select %p165, %s166, %s167
      %p171 = pneg %p165
      %p172 = scmp.eq.s32.totalorder %s22, 7
      %p173 = por %p171, %p172
      %p174 = scmp.ne.s32.totalorder %s166, %s169
      %p175 = scmp.eq.s32.totalorder %s22, 0
      %p176 = por %p174, %p175
      %p177 = scmp.ne.s32.totalorder %s166, %s169
      %p178 = scmp.eq.s32.totalorder %s27, 7
      %p179 = por %p177, %p178
      %p180 = scmp.ne.s32.totalorder %s169, %s170
      %p181 = scmp.eq.s32.totalorder %s27, 0
      %p182 = por %p180, %p181
      %p183 = scmp.ne.s32.totalorder %s169, %s170
      %p184 = scmp.eq.s32.totalorder %s28, 7
      %p185 = por %p183, %p184
      %p187 = scmp.ne.s32.totalorder %s170, %s186
      %p188 = scmp.eq.s32.totalorder %s28, 0
      %p189 = por %p187, %p188
      %p190 = scmp.le.s32.totalorder 1, %s22
      %p191 = scmp.lt.s32.totalorder %s22, 9
      %p192 = pnand %p190, %p191
      %p193 = pneg %p192
      // Predicated region
      $region9: #{tpu_custom_call.1} parent=5 // pred_check
        _
      $region10: #{tpu_custom_call.1} parent=5 // pred_check_branch
        %195 = sbr.rel (%p192) target = $region12
      $region11: #{tpu_custom_call.1} parent=5 // pred_region
        %s196 = ssub.s32 %s22, 1
        // Predicated region
        $region13: #{tpu_custom_call.1} parent=11 // pred_check
          %p197 = pneg %p81
        $region14: #{tpu_custom_call.1} parent=11 // pred_check_branch
          %199 = sbr.rel (%p197) target = $region16
        $region15: #{tpu_custom_call.1} parent=11 // pred_region
          %s201 = ssub.s32 512, 512
          %202 = vsyncadd [#allocation7], %s201
          %s203 = sshll.u32 [#allocation6], 4
          %s204 = int_to_ptr.vmem [resolvable:$true] %s203
          %209 = dma.hbm_to_vmem [thread:$0]  %s1, 512, %s204, [#allocation7], 128, 128, 8
        $region16: #{tpu_custom_call.1} parent=11 // pred_fallthru
          _
        // Predicated region
        $region17: #{tpu_custom_call.1} parent=11 // pred_check
          %p210 = pneg %p102
        $region18: #{tpu_custom_call.1} parent=11 // pred_check_branch
          %212 = sbr.rel (%p210) target = $region20
        $region19: #{tpu_custom_call.1} parent=11 // pred_region
          _
        $region20: #{tpu_custom_call.1} parent=11 // pred_fallthru
          _
      $region12: #{tpu_custom_call.1} parent=5 // pred_fallthru
        _
      %p213 = scmp.lt.s32.totalorder %s22, 8
      // Predicated region
      $region21: #{tpu_custom_call.1} parent=5 // pred_check
        %p214 = pneg %p213
      $region22: #{tpu_custom_call.1} parent=5 // pred_check_branch
        %216 = sbr.rel (%p214) target = $region24
      $region23: #{tpu_custom_call.1} parent=5 // pred_region
        // Predicated region
        $region25: #{tpu_custom_call.1} parent=23 // pred_check
          %p217 = pneg %p54
        $region26: #{tpu_custom_call.1} parent=23 // pred_check_branch
          %219 = sbr.rel (%p217) target = $region28
        $region27: #{tpu_custom_call.1} parent=23 // pred_region
          %s220 = sand.u32 %s44, 1
          %s221 = scalar_lea.sflag [#allocation4], %s220
          %s222 = sand.u32 %s44, 1
          %s223 = smul.addr %s222, 8
          %s224 = scalar_lea.vmem [#allocation3], %s223
          %s226 = ssub.s32 128, 128
          %227 = vsyncadd %s221, %s226
          %s228 = smul.addr %s29, 128
          %s229 = scalar_lea.hbm %s0, %s228
          %s231 = sshll.u32 %s224, 4
          %s232 = int_to_ptr.vmem [resolvable:$true] %s231
          %234 = dma.hbm_to_vmem [thread:$0]  %s229, 128, %s232, %s221
        $region28: #{tpu_custom_call.1} parent=23 // pred_fallthru
          _
        // Predicated region
        $region29: #{tpu_custom_call.1} parent=23 // pred_check
          %p235 = pneg %p122
        $region30: #{tpu_custom_call.1} parent=23 // pred_check_branch
          %237 = sbr.rel (%p235) target = $region32
        $region31: #{tpu_custom_call.1} parent=23 // pred_region
          %p238 = scmp.lt.s32.totalorder %s29, 1
          %s239 = scalar_select %p238, %s29, 1
          %s240 = scalar_lea.vmem %s3, %s239
        $region32: #{tpu_custom_call.1} parent=23 // pred_fallthru
          _
      $region24: #{tpu_custom_call.1} parent=5 // pred_fallthru
        _
      %p241 = scmp.le.s32.totalorder 1, %s22
      %p242 = scmp.lt.s32.totalorder %s22, 9
      %p243 = pnand %p241, %p242
      %p244 = pneg %p243
      // Predicated region
      $region33: #{tpu_custom_call.1} parent=5 // pred_check
        _
      $region34: #{tpu_custom_call.1} parent=5 // pred_check_branch
        %246 = sbr.rel (%p243) target = $region36
      $region35: #{tpu_custom_call.1} parent=5 // pred_region
        %s247 = ssub.s32 %s22, 1
        %s248 = sand.u32 %s47, 1
        %s249 = scalar_lea.sflag [#allocation4], %s248
        %s250 = sand.u32 %s47, 1
        %s251 = smul.addr %s250, 8
        %s252 = scalar_lea.vmem [#allocation3], %s251
        // Predicated region
        $region37: #{tpu_custom_call.1} parent=35 // pred_check
          %p253 = pneg %p60
        $region38: #{tpu_custom_call.1} parent=35 // pred_check_branch
          %255 = sbr.rel (%p253) target = $region40
        $region39: #{tpu_custom_call.1} parent=35 // pred_region
          %256 = dma.done %s249, 128
        $region40: #{tpu_custom_call.1} parent=35 // pred_fallthru
          _
        // Predicated region
        $region41: #{tpu_custom_call.1} parent=35 // pred_check
          %p257 = pneg %p81
        $region42: #{tpu_custom_call.1} parent=35 // pred_check_branch
          %259 = sbr.rel (%p257) target = $region44
        $region43: #{tpu_custom_call.1} parent=35 // pred_region
          %260 = dma.done [#allocation7], 512
        $region44: #{tpu_custom_call.1} parent=35 // pred_fallthru
          _
        %s261 = sand.u32 %s47, 1
        %s262 = scalar_lea.sflag [#allocation4], %s261
        %s263 = sand.u32 %s47, 1
        %s264 = smul.addr %s263, 8
        %s265 = scalar_lea.vmem [#allocation3], %s264
        %p266 = pneg %p60
        %p267 = pneg %p57
        %p268 = pneg %p81
        %p269 = pneg %p78
        %p270 = pneg %p102
        %p271 = pneg %p99
        %p272 = scmp.lt.s32.totalorder %s31, 1
        %s273 = scalar_select %p272, %s31, 1
        %s274 = scalar_lea.vmem %s3, %s273
        %p275 = pneg %p128
        %p276 = pneg %p125
        %p277 = pneg %p156
        %p278 = pneg %p153
        %s279 = sand.u32 %s143, 1
        %s280 = scalar_lea.sflag [#allocation5], %s279
        %s281 = sand.u32 %s143, 1
        %s282 = smul.addr %s281, 8
        %s283 = scalar_lea.vmem [#allocation8], %s282
        %p284 = pneg %p182
        %p285 = pneg %p179
        %s286 = sand.u32 %s169, 1
        %s287 = scalar_lea.sflag [#allocation10], %s286
        %s288 = sand.u32 %s169, 1
        %s289 = smul.addr %s288, 8
        %s290 = scalar_lea.vmem [#allocation9], %s289
        %p291 = scmp.lt.s32.totalorder %s31, 1
        %s292 = scalar_select %p291, %s31, 1
        %s293 = scalar_lea.vmem %s3, %s292
        %p294 = scmp.eq.s32.totalorder %s32, 0
        // Predicated region
        $region45: #{tpu_custom_call.1} parent=35 // pred_check
          %p295 = pneg %p294
        $region46: #{tpu_custom_call.1} parent=35 // pred_check_branch
          %297 = sbr.rel (%p295) target = $region48
        $region47: #{tpu_custom_call.1} parent=35 // pred_region
          %v298 = vld [vmem:[%s252] sm:$0xff]
          %v299 = vld [vmem:[#allocation6] sm:$0xff]
          %v300 = vld [vmem:[#allocation6 + $0x8] sm:$0xff]
          %v301 = vld [vmem:[#allocation6 + $0x10] sm:$0xff]
          %v302 = vld [vmem:[#allocation6 + $0x18] sm:$0xff]
          %v303 = vld [vmem:[%s2] sm:$0x1]
          %v305 = vlaneseq
          %v306 = vshrl.u32 %v305, 7
          %v307 = vsub.s32 0, %v306
          %v308 = vrot.slane %v303, %v307
          %vm310 = vcmask 261120
          %v312 = vsel %vm310, %v298, 0
          %314 = vmatprep.subr.mxu0 0.0
          %315 = vmatpush1.msra.mxu0 %v299
          %316 = vmatprep.subr.mxu0 0.0
          %317 = vmatpush1.msra.mxu0 %v300
          %318 = vmatprep.subr.mxu0 0.0
          %319 = vmatpush1.msra.mxu0 %v301
          %320 = vmatprep.subr.mxu0 0.0
          %321 = vmatpush1.msra.mxu0 %v302
          %322 = vmatprep.subr.mxu0 0.0
          %323 = vmatpush1.msra.mxu0 0.0
          %324 = vmatprep.subr.mxu0 0.0
          %325 = vmatpush1.msra.mxu0 0.0
          %326 = vmatprep.subr.mxu0 0.0
          %327 = vmatpush1.msra.mxu0 0.0
          %328 = vmatprep.subr.mxu0 0.0
          %329 = vmatpush1.msra.mxu0 0.0
          %330 = vmatprep.subr.mxu0 0.0
          %331 = vmatpush1.msra.mxu0 0.0
          %332 = vmatprep.subr.mxu0 0.0
          %333 = vmatpush1.msra.mxu0 0.0
          %334 = vmatprep.subr.mxu0 0.0
          %335 = vmatpush1.msra.mxu0 0.0
          %336 = vmatprep.subr.mxu0 0.0
          %337 = vmatpush1.msra.mxu0 0.0
          %338 = vmatprep.subr.mxu0 0.0
          %339 = vmatpush1.msra.mxu0 0.0
          %340 = vmatprep.subr.mxu0 0.0
          %341 = vmatpush1.msra.mxu0 0.0
          %342 = vmatprep.subr.mxu0 0.0
          %343 = vmatpush1.msra.mxu0 0.0
          %344 = vmatprep.subr.mxu0 0.0
          %345 = vmatpush1.msra.mxu0 0.0
          %346 = vmatprep.subr.mxu0 0.0
          %347 = vmatpush1.msra.mxu0 0.0
          %348 = vmatprep.subr.mxu0 0.0
          %349 = vmatpush1.msra.mxu0 0.0
          %350 = vmatprep.subr.mxu0 0.0
          %351 = vmatpush1.msra.mxu0 0.0
          %352 = vmatprep.subr.mxu0 0.0
          %353 = vmatpush1.msra.mxu0 0.0
          %354 = vmatprep.subr.mxu0 0.0
          %355 = vmatpush1.msra.mxu0 0.0
          %356 = vmatprep.subr.mxu0 0.0
          %357 = vmatpush1.msra.mxu0 0.0
          %358 = vmatprep.subr.mxu0 0.0
          %359 = vmatpush1.msra.mxu0 0.0
          %360 = vmatprep.subr.mxu0 0.0
          %361 = vmatpush1.msra.mxu0 0.0
          %362 = vmatprep.subr.mxu0 0.0
          %363 = vmatpush1.msra.mxu0 0.0
          %364 = vmatprep.subr.mxu0 0.0
          %365 = vmatpush1.msra.mxu0 0.0
          %366 = vmatprep.subr.mxu0 0.0
          %367 = vmatpush1.msra.mxu0 0.0
          %368 = vmatprep.subr.mxu0 0.0
          %369 = vmatpush1.msra.mxu0 0.0
          %370 = vmatprep.subr.mxu0 0.0
          %371 = vmatpush1.msra.mxu0 0.0
          %372 = vmatprep.subr.mxu0 0.0
          %373 = vmatpush1.msra.mxu0 0.0
          %374 = vmatprep.subr.mxu0 0.0
          %375 = vmatpush1.msra.mxu0 0.0
          %376 = vmatprep.subr.mxu0 0.0
          %377 = vmatpush1.msra.mxu0 0.0
          %378 = vmatprep.mubr.f32.mxu0 0.0
          %379 = vmatmul.mubr.f32.gmra.mrb[0].mxu0 %v312
          %v380 = vpop.f32.mrb[0].mxu0
          %v381 = vadd.f32 %v308, %v380
          %v382 = vpop.f32.mrb[0].mxu0
          %383 = vdwg.mxu0
          %385 = vrot.lane.b32.xlu0 %v381, 64
          %v386 = vpop.permute.xlu0 %385
          %388 = vst.msk [vmem:[%s290] sm:$0xff] %vm310, %v386
          %vm389 = vcmask 130048
          %390 = vst.msk [vmem:[#allocation2] sm:$0xff] %vm389, %v381
          %391 = vrot.lane.b32.xlu0 %v381, 112
          %v392 = vpop.permute.xlu0 %391
          %s394 = scalar_lea.vmem [#allocation2], 8
          %395 = vst.msk [vmem:[%s394] sm:$0xff] %vm389, %v392
          %396 = vrot.lane.b32.xlu0 %v381, 96
          %v397 = vpop.permute.xlu0 %396
          %s399 = scalar_lea.vmem [#allocation2], 16
          %400 = vst.msk [vmem:[%s399] sm:$0xff] %vm389, %v397
          %401 = vrot.lane.b32.xlu0 %v381, 80
          %v402 = vpop.permute.xlu0 %401
          %s404 = scalar_lea.vmem [#allocation2], 24
          %405 = vst.msk [vmem:[%s404] sm:$0xff] %vm389, %v402
        $region48: #{tpu_custom_call.1} parent=35 // pred_fallthru
          _
        %s406 = smul.u32 %s32, 8
        %s407 = scalar_lea.vmem [#allocation2], %s406
        %v408 = vld [vmem:[%s407] sm:$0xff]
        %v409 = vld [vmem:[%s293] sm:$0x1]
        %v411 = vlaneseq
        %v412 = vshrl.u32 %v411, 7
        %v413 = vsub.s32 0, %v412
        %v414 = vrot.slane %v409, %v413
        %417 = vrot.lane.b32.xlu0 %v408, 120
        %v418 = vpop.permute.xlu0 %417
        %vm419 = vcmask 64512
        %v420 = vsel %vm419, %v408, 0
        %v422 = vsel %vm419, %v418, 0
        %424 = vmatprep.subr.mxu0 0.0
        %425 = vmatpush1.xpose.msra.mxu0 %v422
        %426 = vmatprep.subr.mxu0 0.0
        %427 = vmatpush1.xpose.msra.mxu0 0.0
        %428 = vmatprep.subr.mxu0 0.0
        %429 = vmatpush1.xpose.msra.mxu0 0.0
        %430 = vmatprep.subr.mxu0 0.0
        %431 = vmatpush1.xpose.msra.mxu0 0.0
        %432 = vmatprep.subr.mxu0 0.0
        %433 = vmatpush1.xpose.msra.mxu0 0.0
        %434 = vmatprep.subr.mxu0 0.0
        %435 = vmatpush1.xpose.msra.mxu0 0.0
        %436 = vmatprep.subr.mxu0 0.0
        %437 = vmatpush1.xpose.msra.mxu0 0.0
        %438 = vmatprep.subr.mxu0 0.0
        %439 = vmatpush1.xpose.msra.mxu0 0.0
        %440 = vmatprep.subr.mxu0 0.0
        %441 = vmatpush1.xpose.msra.mxu0 0.0
        %442 = vmatprep.subr.mxu0 0.0
        %443 = vmatpush1.xpose.msra.mxu0 0.0
        %444 = vmatprep.subr.mxu0 0.0
        %445 = vmatpush1.xpose.msra.mxu0 0.0
        %446 = vmatprep.subr.mxu0 0.0
        %447 = vmatpush1.xpose.msra.mxu0 0.0
        %448 = vmatprep.subr.mxu0 0.0
        %449 = vmatpush1.xpose.msra.mxu0 0.0
        %450 = vmatprep.subr.mxu0 0.0
        %451 = vmatpush1.xpose.msra.mxu0 0.0
        %452 = vmatprep.subr.mxu0 0.0
        %453 = vmatpush1.xpose.msra.mxu0 0.0
        %454 = vmatprep.subr.mxu0 0.0
        %455 = vmatpush1.xpose.msra.mxu0 0.0
        %456 = vmatprep.subr.mxu0 0.0
        %457 = vmatpush1.xpose.msra.mxu0 0.0
        %458 = vmatprep.subr.mxu0 0.0
        %459 = vmatpush1.xpose.msra.mxu0 0.0
        %460 = vmatprep.subr.mxu0 0.0
        %461 = vmatpush1.xpose.msra.mxu0 0.0
        %462 = vmatprep.subr.mxu0 0.0
        %463 = vmatpush1.xpose.msra.mxu0 0.0
        %464 = vmatprep.subr.mxu0 0.0
        %465 = vmatpush1.xpose.msra.mxu0 0.0
        %466 = vmatprep.subr.mxu0 0.0
        %467 = vmatpush1.xpose.msra.mxu0 0.0
        %468 = vmatprep.subr.mxu0 0.0
        %469 = vmatpush1.xpose.msra.mxu0 0.0
        %470 = vmatprep.subr.mxu0 0.0
        %471 = vmatpush1.xpose.msra.mxu0 0.0
        %472 = vmatprep.subr.mxu0 0.0
        %473 = vmatpush1.xpose.msra.mxu0 0.0
        %474 = vmatprep.subr.mxu0 0.0
        %475 = vmatpush1.xpose.msra.mxu0 0.0
        %476 = vmatprep.subr.mxu0 0.0
        %477 = vmatpush1.xpose.msra.mxu0 0.0
        %478 = vmatprep.subr.mxu0 0.0
        %479 = vmatpush1.xpose.msra.mxu0 0.0
        %480 = vmatprep.subr.mxu0 0.0
        %481 = vmatpush1.xpose.msra.mxu0 0.0
        %482 = vmatprep.subr.mxu0 0.0
        %483 = vmatpush1.xpose.msra.mxu0 0.0
        %484 = vmatprep.subr.mxu0 0.0
        %485 = vmatpush1.xpose.msra.mxu0 0.0
        %486 = vmatprep.subr.mxu0 0.0
        %487 = vmatpush1.xpose.msra.mxu0 0.0
        %488 = vmatprep.mubr.f32.mxu0 0.0
        %489 = vmatmul.mubr.f32.gmra.mrb[0].mxu0 %v420
        %v490 = vpop.f32.mrb[0].mxu0
        %v491 = vadd.f32 %v414, %v490
        %v492 = vpop.f32.mrb[0].mxu0
        %493 = vdwg.mxu0
        %v494 = vsel %vm419, %v491, -inf
        %495 = vmax.xlane.f32.xlu0 %v494
        %v496 = vpop.xlane.xlu0 %495
        %v497 = vsub.f32 %v491, %v496
        %v498 = vmul.f32 %v497, 1.442695
        %v499 = vpow.pop %v498
        %v500 = vsel %vm419, %v499, 0.0
        %501 = vadd.xlane.f32.xlu0 %v500
        %v502 = vpop.xlane.xlu0 %501
        %v503 = vrcp.pop %v502
        %v504 = vmul.f32 %v499, %v503
        %505 = vst.msk [vmem:[%s283] sm:$0xff] %vm419, %v504
        %s506 = sand.u32 %s143, 1
        %s507 = scalar_lea.sflag [#allocation5], %s506
        %s508 = sand.u32 %s143, 1
        %s509 = smul.addr %s508, 8
        %s510 = scalar_lea.vmem [#allocation8], %s509
        %s511 = sand.u32 %s169, 1
        %s512 = scalar_lea.sflag [#allocation10], %s511
        %s513 = sand.u32 %s169, 1
        %s514 = smul.addr %s513, 8
        %s515 = scalar_lea.vmem [#allocation9], %s514
        // Predicated region
        $region49: #{tpu_custom_call.1} parent=35 // pred_check
          %p516 = pneg %p153
        $region50: #{tpu_custom_call.1} parent=35 // pred_check_branch
          %518 = sbr.rel (%p516) target = $region52
        $region51: #{tpu_custom_call.1} parent=35 // pred_region
          %s520 = ssub.s32 128, 128
          %521 = vsyncadd %s507, %s520
          %s522 = smul.addr %s31, 4
          %s523 = sadd.s32 %s32, %s522
          %s524 = smul.addr %s523, 128
          %s525 = scalar_lea.hbm %s4, %s524
          %s527 = sshll.u32 %s510, 4
          %s528 = int_to_ptr.vmem [resolvable:$true] %s527
          %530 = dma.vmem_to_hbm [thread:$0]  %s528, 128, %s525, %s507
        $region52: #{tpu_custom_call.1} parent=35 // pred_fallthru
          _
        // Predicated region
        $region53: #{tpu_custom_call.1} parent=35 // pred_check
          %p531 = pneg %p179
        $region54: #{tpu_custom_call.1} parent=35 // pred_check_branch
          %533 = sbr.rel (%p531) target = $region56
        $region55: #{tpu_custom_call.1} parent=35 // pred_region
          %s535 = ssub.s32 128, 128
          %536 = vsyncadd %s512, %s535
          %s537 = smul.addr %s31, 128
          %s538 = scalar_lea.hbm %s5, %s537
          %s540 = sshll.u32 %s515, 4
          %s541 = int_to_ptr.vmem [resolvable:$true] %s540
          %543 = dma.vmem_to_hbm [thread:$0]  %s541, 128, %s538, %s512
        $region56: #{tpu_custom_call.1} parent=35 // pred_fallthru
          _
      $region36: #{tpu_custom_call.1} parent=5 // pred_fallthru
        _
      %p544 = scmp.le.s32.totalorder 2, %s22
      // Predicated region
      $region57: #{tpu_custom_call.1} parent=5 // pred_check
        %p545 = pneg %p544
      $region58: #{tpu_custom_call.1} parent=5 // pred_check_branch
        %547 = sbr.rel (%p545) target = $region60
      $region59: #{tpu_custom_call.1} parent=5 // pred_region
        %s548 = ssub.s32 %s22, 2
        // Predicated region
        $region61: #{tpu_custom_call.1} parent=59 // pred_check
          %p549 = pneg %p159
        $region62: #{tpu_custom_call.1} parent=59 // pred_check_branch
          %551 = sbr.rel (%p549) target = $region64
        $region63: #{tpu_custom_call.1} parent=59 // pred_region
          %s552 = sand.u32 %s144, 1
          %s553 = scalar_lea.sflag [#allocation5], %s552
          %s554 = sand.u32 %s144, 1
          %s555 = smul.addr %s554, 8
          %s556 = scalar_lea.vmem [#allocation8], %s555
          %557 = dma.done %s553, 128
        $region64: #{tpu_custom_call.1} parent=59 // pred_fallthru
          _
        // Predicated region
        $region65: #{tpu_custom_call.1} parent=59 // pred_check
          %p558 = pneg %p185
        $region66: #{tpu_custom_call.1} parent=59 // pred_check_branch
          %560 = sbr.rel (%p558) target = $region68
        $region67: #{tpu_custom_call.1} parent=59 // pred_region
          %s561 = sand.u32 %s170, 1
          %s562 = scalar_lea.sflag [#allocation10], %s561
          %s563 = sand.u32 %s170, 1
          %s564 = smul.addr %s563, 8
          %s565 = scalar_lea.vmem [#allocation9], %s564
          %566 = dma.done %s562, 128
        $region68: #{tpu_custom_call.1} parent=59 // pred_fallthru
          _
      $region60: #{tpu_custom_call.1} parent=5 // pred_fallthru
        _
    $region6: #{tpu_custom_call.1} parent=1 // loop_footer
      %s26 = sadd.s32 1, %s22
    $region7: #{tpu_custom_call.1} parent=1 // loop_footer_branch
      %21 = sbr.rel target = $region3
    $region8: #{tpu_custom_call.1} parent=1 // loop_exit
      _
    %567 = vsyncpa [#allocation4], 1
    %s568 = scalar_lea.sflag [#allocation4], 1
    %569 = vsyncpa %s568, 1
    %570 = vsyncpa [#allocation7], 1
    %571 = vsyncpa [#allocation5], 1
    %s572 = scalar_lea.sflag [#allocation5], 1
    %573 = vsyncpa %s572, 1
    %574 = vsyncpa [#allocation10], 1
    %s575 = scalar_lea.sflag [#allocation10], 1
    %576 = vsyncpa %s575, 1

</llo_original>
